<compile_context>
chip_gen: v5e
topology: v5e:2x2
jax: 0.10.0
libtpu: 0.0.40
codegen_flags: <defaults>
</compile_context>

<pallas_src>
import functools

import jax
import jax.numpy as jnp
from jax import lax
from jax.experimental import pallas as pl
from jax.experimental.pallas import tpu as pltpu

BN_EPS = 1e-5
NEG_SLOPE = 0.1
VMEM_LIMIT_BYTES = 32 * 1024 * 1024   # safe for v5e/v6e/v7x scoped-VMEM budgets


def _round_up(x, m):
    return (x + m - 1) // m * m


# ---------------------------------------------------------------------------
# Pass 1: conv (kh*kw shifted matmuls, bf16 -> fp32) + per-image BN partials.
# Grid = (N,): one padded image resident in VMEM per step (pipelined over N).
# ---------------------------------------------------------------------------
def _conv_stats_kernel(x_ref, w_ref, mask_ref, conv_ref, s1_ref, s2_ref,
                       *, kh, kw, wp, hwp):
    # x_ref   : (1, Cin_p, FLAT)     bf16  flattened zero-padded image (+ slack)
    # w_ref   : (kh*kw, Cout, Cin_p) bf16  per-tap weights
    # mask_ref: (1, HWP)             f32   1.0 on valid output columns
    # conv_ref: (1, Cout, HWP)       f32   conv output, width still padded
    # s1/s2   : (1, Cout, 1)         f32   per-image per-channel sum / sum-sq
    cout = conv_ref.shape[1]
    acc = jnp.zeros((cout, hwp), dtype=jnp.float32)
    for k in range(kh * kw):                       # unrolled: taps are static
        r, c = k // kw, k % kw
        start = r * wp + c                         # static lane offset
        xs = x_ref[0, :, start:start + hwp]        # (Cin_p, HWP) bf16 view
        acc = acc + jnp.dot(w_ref[k], xs, preferred_element_type=jnp.float32)
    conv_ref[0] = acc

    # Streaming BN statistics (fp32 accumulators), padded columns masked out.
    masked = acc * mask_ref[...]
    s1_ref[0] = jnp.sum(masked, axis=1, keepdims=True)
    s2_ref[0] = jnp.sum(masked * acc, axis=1, keepdims=True)


# ---------------------------------------------------------------------------
# Pass 2: y = conv * scale + shift ; LeakyReLU(0.1).  Strips width padding and
# writes the final NCHW tensor directly (no wrapper transpose).
# ---------------------------------------------------------------------------
def _bn_act_kernel(conv_ref, scale_ref, shift_ref, o_ref):
    w_out = o_ref.shape[-1]
    x = conv_ref[...][:, :, :, :w_out]             # (1, Cout, TH, W) fp32
    y = x * scale_ref[...] + shift_ref[...]        # per-channel scale/shift
    o_ref[...] = jnp.where(y > 0, y, NEG_SLOPE * y)


def cnn_block_forward(x_nchw, weight, bias, gamma, beta, *, kh=3, kw=3, pad=1):
    """Conv2d(kh x kw, stride 1, padding=pad) -> BatchNorm2d(batch stats) -> LeakyReLU(0.1).

    `bias` is accepted for API parity with nn.Conv2d but never used: with
    training-mode BatchNorm right after the conv, a per-channel bias is
    exactly cancelled by the mean subtraction.
    """
    # TODO(synk): stride > 1 CNNBlock variants (used elsewhere in YOLOv3) are
    # not implemented by this stride-1 formulation.
    del bias
    N, Cin, H, W = x_nchw.shape
    Cout = weight.shape[0]
    Hp, Wp = H + 2 * pad, W + 2 * pad
    H_out, W_out = Hp - kh + 1, Wp - kw + 1
    HWP = H_out * Wp                              # conv rows kept width-padded
    FLAT = _round_up(Hp * Wp + kw - 1, 128)       # lane-aligned + tap slack
    Cin_p = _round_up(Cin, 8)                     # sublane-align the K dim

    # ---- host-side prep: layout only, stays NCHW (no transposes) ----
    xp = jnp.pad(x_nchw, ((0, 0), (0, Cin_p - Cin), (pad, pad), (pad, pad)))
    x_flat = xp.reshape(N, Cin_p, Hp * Wp)
    x_flat = jnp.pad(x_flat, ((0, 0), (0, 0), (0, FLAT - Hp * Wp)))
    x_flat = x_flat.astype(jnp.bfloat16)          # bf16 MXU operands

    # (Cout, Cin, kh, kw) -> (kh*kw, Cout, Cin_p) bf16 taps
    w_taps = jnp.transpose(weight, (2, 3, 0, 1)).reshape(kh * kw, Cout, Cin)
    w_taps = jnp.pad(w_taps, ((0, 0), (0, 0), (0, Cin_p - Cin)))
    w_taps = w_taps.astype(jnp.bfloat16)

    # valid-column mask over the width-padded conv rows (for the BN stats)
    col = jnp.arange(HWP, dtype=jnp.int32) % Wp
    mask = (col < W_out).astype(jnp.float32).reshape(1, HWP)

    # ---- pass 1: conv + partial BN stats ----
    kernel1 = functools.partial(_conv_stats_kernel, kh=kh, kw=kw, wp=Wp, hwp=HWP)
    conv_flat, s1, s2 = pl.pallas_call(
        kernel1,
        out_shape=(
            jax.ShapeDtypeStruct((N, Cout, HWP), jnp.float32),
            jax.ShapeDtypeStruct((N, Cout, 1), jnp.float32),
            jax.ShapeDtypeStruct((N, Cout, 1), jnp.float32),
        ),
        grid=(N,),
        in_specs=[
            pl.BlockSpec((1, Cin_p, FLAT), lambda n: (n, 0, 0)),
            pl.BlockSpec((kh * kw, Cout, Cin_p), lambda n: (0, 0, 0)),
            pl.BlockSpec((1, HWP), lambda n: (0, 0)),
        ],
        out_specs=(
            pl.BlockSpec((1, Cout, HWP), lambda n: (n, 0, 0)),
            pl.BlockSpec((1, Cout, 1), lambda n: (n, 0, 0)),
            pl.BlockSpec((1, Cout, 1), lambda n: (n, 0, 0)),
        ),
        compiler_params=pltpu.CompilerParams(
            dimension_semantics=("parallel",),
            vmem_limit_bytes=VMEM_LIMIT_BYTES,
        ),
    )(x_flat, w_taps, mask)

    # ---- tiny wrapper reduction: fold batch stats into scale / shift ----
    count = jnp.float32(N * H_out * W_out)
    sum1 = jnp.sum(s1, axis=0)[:, 0]                         # (Cout,)
    sum2 = jnp.sum(s2, axis=0)[:, 0]
    mean = sum1 / count
    var = jnp.maximum(sum2 / count - mean * mean, 0.0)       # biased batch var
    inv_std = lax.rsqrt(var + BN_EPS)
    scale = gamma.astype(jnp.float32) * inv_std
    shift = beta.astype(jnp.float32) - mean * scale
    scale4 = scale.reshape(1, Cout, 1, 1)
    shift4 = shift.reshape(1, Cout, 1, 1)

    # ---- pass 2: BN + LeakyReLU over a row-tiled grid, writes NCHW ----
    conv4 = conv_flat.reshape(N, Cout, H_out, Wp)            # free reshape
    # Demo row tile; for production sizes pick the largest TH that keeps the
    # double-buffered (1, Cout, TH, Wp) fp32 block within the VMEM budget.
    TH = 8 if H_out % 8 == 0 else H_out
    out = pl.pallas_call(
        _bn_act_kernel,
        out_shape=jax.ShapeDtypeStruct((N, Cout, H_out, W_out), jnp.float32),
        grid=(N, H_out // TH),
        in_specs=[
            pl.BlockSpec((1, Cout, TH, Wp), lambda n, t: (n, 0, t, 0)),
            pl.BlockSpec((1, Cout, 1, 1), lambda n, t: (0, 0, 0, 0)),
            pl.BlockSpec((1, Cout, 1, 1), lambda n, t: (0, 0, 0, 0)),
        ],
        out_specs=pl.BlockSpec((1, Cout, TH, W_out), lambda n, t: (n, 0, t, 0)),
        compiler_params=pltpu.CompilerParams(
            dimension_semantics=("parallel", "parallel"),
            vmem_limit_bytes=VMEM_LIMIT_BYTES,
        ),
    )(conv4, scale4, shift4)
    return out


def reference_forward(x_nchw, weight, bias, gamma, beta, *, pad=1):
    """Pure-JAX reference. Matmul operands are rounded to bf16 exactly like the
    kernel (fp32 accumulation), so comparison tolerances stay tight."""
    xb = x_nchw.astype(jnp.bfloat16).astype(jnp.float32)
    wb = weight.astype(jnp.bfloat16).astype(jnp.float32)
    conv = lax.conv_general_dilated(
        xb, wb, window_strides=(1, 1), padding=((pad, pad), (pad, pad)),
        dimension_numbers=("NCHW", "OIHW", "NCHW"),
        precision=lax.Precision.HIGHEST)
    conv = conv + bias.reshape(1, -1, 1, 1)      # cancelled by BN below
    mean = jnp.mean(conv, axis=(0, 2, 3), keepdims=True)
    var = jnp.mean((conv - mean) ** 2, axis=(0, 2, 3), keepdims=True)
    y = (conv - mean) * lax.rsqrt(var + BN_EPS)
    y = y * gamma.reshape(1, -1, 1, 1) + beta.reshape(1, -1, 1, 1)
    return jnp.where(y > 0, y, NEG_SLOPE * y)


if __name__ == "__main__":
    N, Cin, H, W = 2, 4, 16, 16
    Cout, KH, KW = 8, 3, 3

    key = jax.random.PRNGKey(0)
    kx, kw_, kb, kg, kbe = jax.random.split(key, 5)
    x = jax.random.normal(kx, (N, Cin, H, W), dtype=jnp.float32)
    weight = jax.random.normal(kw_, (Cout, Cin, KH, KW), dtype=jnp.float32) * 0.1
    bias = jax.random.normal(kb, (Cout,), dtype=jnp.float32) * 0.1
    gamma = 1.0 + 0.1 * jax.random.normal(kg, (Cout,), dtype=jnp.float32)
    beta = 0.1 * jax.random.normal(kbe, (Cout,), dtype=jnp.float32)

    fwd = jax.jit(functools.partial(cnn_block_forward, kh=KH, kw=KW, pad=1))
    out = jax.block_until_ready(fwd(x, weight, bias, gamma, beta))

    ref = jax.block_until_ready(
        reference_forward(x, weight, bias, gamma, beta, pad=1))
    assert out.shape == (N, Cout, H, W), out.shape
    max_err = float(jnp.max(jnp.abs(out - ref)))
    assert jnp.allclose(out, ref, atol=1e-3, rtol=1e-3), f"mismatch: {max_err}"

    print("KERNEL_OK")
</pallas_src>

<mosaic_0001>
module attributes {stable_mosaic.version = 11 : i64} {
  func.func @_conv_stats_kernel(%arg0: i32, %arg1: memref<1x8x384xbf16, #tpu.memory_space<vmem>>, %arg2: memref<9x8x8xbf16, #tpu.memory_space<vmem>>, %arg3: memref<1x288xf32, #tpu.memory_space<vmem>>, %arg4: memref<1x8x288xf32, #tpu.memory_space<vmem>>, %arg5: memref<1x8x1xf32, #tpu.memory_space<vmem>>, %arg6: memref<1x8x1xf32, #tpu.memory_space<vmem>>) attributes {dimension_semantics = [#tpu.dimension_semantics<parallel>], iteration_bounds = array<i64: 2>, scalar_prefetch = 0 : i64, scratch_operands = 0 : i64, tpu.core_type = #tpu.core_type<tc>, window_params = [{transform_indices = @transform_0, window_bounds = array<i64: 1, 8, 384>}, {pipeline_mode = #tpu.pipeline_mode<synchronous>, transform_indices = @transform_1, window_bounds = array<i64: 9, 8, 8>}, {pipeline_mode = #tpu.pipeline_mode<synchronous>, transform_indices = @transform_2, window_bounds = array<i64: 1, 288>}, {transform_indices = @transform_3, window_bounds = array<i64: 1, 8, 288>}, {transform_indices = @transform_4, window_bounds = array<i64: 1, 8, 1>}, {transform_indices = @transform_5, window_bounds = array<i64: 1, 8, 1>}]} {
    %cst = arith.constant 0.000000e+00 : f32
    %0 = vector.broadcast %cst : f32 to vector<8x288xf32>
    %c0 = arith.constant 0 : index
    %c0_0 = arith.constant 0 : index
    %c0_1 = arith.constant 0 : index
    %1 = vector.load %arg1[%c0, %c0_0, %c0_1] : memref<1x8x384xbf16, #tpu.memory_space<vmem>>, vector<1x8x288xbf16>
    %2 = vector.shape_cast %1 : vector<1x8x288xbf16> to vector<8x288xbf16>
    %c0_2 = arith.constant 0 : index
    %c0_3 = arith.constant 0 : index
    %c0_4 = arith.constant 0 : index
    %3 = vector.load %arg2[%c0_2, %c0_3, %c0_4] : memref<9x8x8xbf16, #tpu.memory_space<vmem>>, vector<1x8x8xbf16>
    %4 = vector.shape_cast %3 : vector<1x8x8xbf16> to vector<8x8xbf16>
    %cst_5 = arith.constant dense<0.000000e+00> : vector<8x288xf32>
    %5 = tpu.matmul %4, %2, %cst_5 {dimension_numbers = #tpu.dot_dimension_numbers<[1], [0], [0], [1], [0, 0, 1, 1], [], []>} : vector<8x8xbf16>, vector<8x288xbf16>, vector<8x288xf32> -> vector<8x288xf32>
    %6 = arith.addf %0, %5 : vector<8x288xf32>
    %c0_6 = arith.constant 0 : index
    %c0_7 = arith.constant 0 : index
    %c1 = arith.constant 1 : index
    %7 = vector.load %arg1[%c0_6, %c0_7, %c1] : memref<1x8x384xbf16, #tpu.memory_space<vmem>>, vector<1x8x288xbf16>
    %8 = vector.shape_cast %7 : vector<1x8x288xbf16> to vector<8x288xbf16>
    %c1_8 = arith.constant 1 : index
    %c0_9 = arith.constant 0 : index
    %c0_10 = arith.constant 0 : index
    %9 = vector.load %arg2[%c1_8, %c0_9, %c0_10] : memref<9x8x8xbf16, #tpu.memory_space<vmem>>, vector<1x8x8xbf16>
    %10 = vector.shape_cast %9 : vector<1x8x8xbf16> to vector<8x8xbf16>
    %cst_11 = arith.constant dense<0.000000e+00> : vector<8x288xf32>
    %11 = tpu.matmul %10, %8, %cst_11 {dimension_numbers = #tpu.dot_dimension_numbers<[1], [0], [0], [1], [0, 0, 1, 1], [], []>} : vector<8x8xbf16>, vector<8x288xbf16>, vector<8x288xf32> -> vector<8x288xf32>
    %12 = arith.addf %6, %11 : vector<8x288xf32>
    %c0_12 = arith.constant 0 : index
    %c0_13 = arith.constant 0 : index
    %c2 = arith.constant 2 : index
    %13 = vector.load %arg1[%c0_12, %c0_13, %c2] : memref<1x8x384xbf16, #tpu.memory_space<vmem>>, vector<1x8x288xbf16>
    %14 = vector.shape_cast %13 : vector<1x8x288xbf16> to vector<8x288xbf16>
    %c2_14 = arith.constant 2 : index
    %c0_15 = arith.constant 0 : index
    %c0_16 = arith.constant 0 : index
    %15 = vector.load %arg2[%c2_14, %c0_15, %c0_16] : memref<9x8x8xbf16, #tpu.memory_space<vmem>>, vector<1x8x8xbf16>
    %16 = vector.shape_cast %15 : vector<1x8x8xbf16> to vector<8x8xbf16>
    %cst_17 = arith.constant dense<0.000000e+00> : vector<8x288xf32>
    %17 = tpu.matmul %16, %14, %cst_17 {dimension_numbers = #tpu.dot_dimension_numbers<[1], [0], [0], [1], [0, 0, 1, 1], [], []>} : vector<8x8xbf16>, vector<8x288xbf16>, vector<8x288xf32> -> vector<8x288xf32>
    %18 = arith.addf %12, %17 : vector<8x288xf32>
    %c0_18 = arith.constant 0 : index
    %c0_19 = arith.constant 0 : index
    %c18 = arith.constant 18 : index
    %19 = vector.load %arg1[%c0_18, %c0_19, %c18] : memref<1x8x384xbf16, #tpu.memory_space<vmem>>, vector<1x8x288xbf16>
    %20 = vector.shape_cast %19 : vector<1x8x288xbf16> to vector<8x288xbf16>
    %c3 = arith.constant 3 : index
    %c0_20 = arith.constant 0 : index
    %c0_21 = arith.constant 0 : index
    %21 = vector.load %arg2[%c3, %c0_20, %c0_21] : memref<9x8x8xbf16, #tpu.memory_space<vmem>>, vector<1x8x8xbf16>
    %22 = vector.shape_cast %21 : vector<1x8x8xbf16> to vector<8x8xbf16>
    %cst_22 = arith.constant dense<0.000000e+00> : vector<8x288xf32>
    %23 = tpu.matmul %22, %20, %cst_22 {dimension_numbers = #tpu.dot_dimension_numbers<[1], [0], [0], [1], [0, 0, 1, 1], [], []>} : vector<8x8xbf16>, vector<8x288xbf16>, vector<8x288xf32> -> vector<8x288xf32>
    %24 = arith.addf %18, %23 : vector<8x288xf32>
    %c0_23 = arith.constant 0 : index
    %c0_24 = arith.constant 0 : index
    %c19 = arith.constant 19 : index
    %25 = vector.load %arg1[%c0_23, %c0_24, %c19] : memref<1x8x384xbf16, #tpu.memory_space<vmem>>, vector<1x8x288xbf16>
    %26 = vector.shape_cast %25 : vector<1x8x288xbf16> to vector<8x288xbf16>
    %c4 = arith.constant 4 : index
    %c0_25 = arith.constant 0 : index
    %c0_26 = arith.constant 0 : index
    %27 = vector.load %arg2[%c4, %c0_25, %c0_26] : memref<9x8x8xbf16, #tpu.memory_space<vmem>>, vector<1x8x8xbf16>
    %28 = vector.shape_cast %27 : vector<1x8x8xbf16> to vector<8x8xbf16>
    %cst_27 = arith.constant dense<0.000000e+00> : vector<8x288xf32>
    %29 = tpu.matmul %28, %26, %cst_27 {dimension_numbers = #tpu.dot_dimension_numbers<[1], [0], [0], [1], [0, 0, 1, 1], [], []>} : vector<8x8xbf16>, vector<8x288xbf16>, vector<8x288xf32> -> vector<8x288xf32>
    %30 = arith.addf %24, %29 : vector<8x288xf32>
    %c0_28 = arith.constant 0 : index
    %c0_29 = arith.constant 0 : index
    %c20 = arith.constant 20 : index
    %31 = vector.load %arg1[%c0_28, %c0_29, %c20] : memref<1x8x384xbf16, #tpu.memory_space<vmem>>, vector<1x8x288xbf16>
    %32 = vector.shape_cast %31 : vector<1x8x288xbf16> to vector<8x288xbf16>
    %c5 = arith.constant 5 : index
    %c0_30 = arith.constant 0 : index
    %c0_31 = arith.constant 0 : index
    %33 = vector.load %arg2[%c5, %c0_30, %c0_31] : memref<9x8x8xbf16, #tpu.memory_space<vmem>>, vector<1x8x8xbf16>
    %34 = vector.shape_cast %33 : vector<1x8x8xbf16> to vector<8x8xbf16>
    %cst_32 = arith.constant dense<0.000000e+00> : vector<8x288xf32>
    %35 = tpu.matmul %34, %32, %cst_32 {dimension_numbers = #tpu.dot_dimension_numbers<[1], [0], [0], [1], [0, 0, 1, 1], [], []>} : vector<8x8xbf16>, vector<8x288xbf16>, vector<8x288xf32> -> vector<8x288xf32>
    %36 = arith.addf %30, %35 : vector<8x288xf32>
    %c0_33 = arith.constant 0 : index
    %c0_34 = arith.constant 0 : index
    %c36 = arith.constant 36 : index
    %37 = vector.load %arg1[%c0_33, %c0_34, %c36] : memref<1x8x384xbf16, #tpu.memory_space<vmem>>, vector<1x8x288xbf16>
    %38 = vector.shape_cast %37 : vector<1x8x288xbf16> to vector<8x288xbf16>
    %c6 = arith.constant 6 : index
    %c0_35 = arith.constant 0 : index
    %c0_36 = arith.constant 0 : index
    %39 = vector.load %arg2[%c6, %c0_35, %c0_36] : memref<9x8x8xbf16, #tpu.memory_space<vmem>>, vector<1x8x8xbf16>
    %40 = vector.shape_cast %39 : vector<1x8x8xbf16> to vector<8x8xbf16>
    %cst_37 = arith.constant dense<0.000000e+00> : vector<8x288xf32>
    %41 = tpu.matmul %40, %38, %cst_37 {dimension_numbers = #tpu.dot_dimension_numbers<[1], [0], [0], [1], [0, 0, 1, 1], [], []>} : vector<8x8xbf16>, vector<8x288xbf16>, vector<8x288xf32> -> vector<8x288xf32>
    %42 = arith.addf %36, %41 : vector<8x288xf32>
    %c0_38 = arith.constant 0 : index
    %c0_39 = arith.constant 0 : index
    %c37 = arith.constant 37 : index
    %43 = vector.load %arg1[%c0_38, %c0_39, %c37] : memref<1x8x384xbf16, #tpu.memory_space<vmem>>, vector<1x8x288xbf16>
    %44 = vector.shape_cast %43 : vector<1x8x288xbf16> to vector<8x288xbf16>
    %c7 = arith.constant 7 : index
    %c0_40 = arith.constant 0 : index
    %c0_41 = arith.constant 0 : index
    %45 = vector.load %arg2[%c7, %c0_40, %c0_41] : memref<9x8x8xbf16, #tpu.memory_space<vmem>>, vector<1x8x8xbf16>
    %46 = vector.shape_cast %45 : vector<1x8x8xbf16> to vector<8x8xbf16>
    %cst_42 = arith.constant dense<0.000000e+00> : vector<8x288xf32>
    %47 = tpu.matmul %46, %44, %cst_42 {dimension_numbers = #tpu.dot_dimension_numbers<[1], [0], [0], [1], [0, 0, 1, 1], [], []>} : vector<8x8xbf16>, vector<8x288xbf16>, vector<8x288xf32> -> vector<8x288xf32>
    %48 = arith.addf %42, %47 : vector<8x288xf32>
    %c0_43 = arith.constant 0 : index
    %c0_44 = arith.constant 0 : index
    %c38 = arith.constant 38 : index
    %49 = vector.load %arg1[%c0_43, %c0_44, %c38] : memref<1x8x384xbf16, #tpu.memory_space<vmem>>, vector<1x8x288xbf16>
    %50 = vector.shape_cast %49 : vector<1x8x288xbf16> to vector<8x288xbf16>
    %c8 = arith.constant 8 : index
    %c0_45 = arith.constant 0 : index
    %c0_46 = arith.constant 0 : index
    %51 = vector.load %arg2[%c8, %c0_45, %c0_46] : memref<9x8x8xbf16, #tpu.memory_space<vmem>>, vector<1x8x8xbf16>
    %52 = vector.shape_cast %51 : vector<1x8x8xbf16> to vector<8x8xbf16>
    %cst_47 = arith.constant dense<0.000000e+00> : vector<8x288xf32>
    %53 = tpu.matmul %52, %50, %cst_47 {dimension_numbers = #tpu.dot_dimension_numbers<[1], [0], [0], [1], [0, 0, 1, 1], [], []>} : vector<8x8xbf16>, vector<8x288xbf16>, vector<8x288xf32> -> vector<8x288xf32>
    %54 = arith.addf %48, %53 : vector<8x288xf32>
    %c0_48 = arith.constant 0 : index
    %c0_49 = arith.constant 0 : index
    %c0_50 = arith.constant 0 : index
    %55 = vector.load %arg4[%c0_48, %c0_49, %c0_50] : memref<1x8x288xf32, #tpu.memory_space<vmem>>, vector<1x8x288xf32>
    %56 = vector.shape_cast %55 : vector<1x8x288xf32> to vector<8x288xf32>
    %57 = vector.shape_cast %54 : vector<8x288xf32> to vector<1x8x288xf32>
    tpu.vector_store %arg4[%c0_48, %c0_49, %c0_50], %57 {strides = array<i32>} : memref<1x8x288xf32, #tpu.memory_space<vmem>>, vector<1x8x288xf32>,
    %c0_51 = arith.constant 0 : index
    %c0_52 = arith.constant 0 : index
    %58 = vector.load %arg3[%c0_51, %c0_52] : memref<1x288xf32, #tpu.memory_space<vmem>>, vector<1x288xf32>
    %59 = vector.broadcast %58 : vector<1x288xf32> to vector<8x288xf32>
    %60 = arith.mulf %54, %59 : vector<8x288xf32>
    %cst_53 = arith.constant dense<0.000000e+00> : vector<8xf32>
    %61 = vector.multi_reduction <add>, %60, %cst_53 [1] : vector<8x288xf32> to vector<8xf32>
    %62 = vector.shape_cast %61 : vector<8xf32> to vector<8x1xf32>
    %c0_54 = arith.constant 0 : index
    %c0_55 = arith.constant 0 : index
    %c0_56 = arith.constant 0 : index
    %63 = vector.load %arg5[%c0_54, %c0_55, %c0_56] : memref<1x8x1xf32, #tpu.memory_space<vmem>>, vector<1x8x1xf32>
    %64 = vector.shape_cast %63 : vector<1x8x1xf32> to vector<8x1xf32>
    %65 = vector.shape_cast %62 : vector<8x1xf32> to vector<1x8x1xf32>
    tpu.vector_store %arg5[%c0_54, %c0_55, %c0_56], %65 {strides = array<i32>} : memref<1x8x1xf32, #tpu.memory_space<vmem>>, vector<1x8x1xf32>,
    %66 = arith.mulf %60, %54 : vector<8x288xf32>
    %cst_57 = arith.constant dense<0.000000e+00> : vector<8xf32>
    %67 = vector.multi_reduction <add>, %66, %cst_57 [1] : vector<8x288xf32> to vector<8xf32>
    %68 = vector.shape_cast %67 : vector<8xf32> to vector<8x1xf32>
    %c0_58 = arith.constant 0 : index
    %c0_59 = arith.constant 0 : index
    %c0_60 = arith.constant 0 : index
    %69 = vector.load %arg6[%c0_58, %c0_59, %c0_60] : memref<1x8x1xf32, #tpu.memory_space<vmem>>, vector<1x8x1xf32>
    %70 = vector.shape_cast %69 : vector<1x8x1xf32> to vector<8x1xf32>
    %71 = vector.shape_cast %68 : vector<8x1xf32> to vector<1x8x1xf32>
    tpu.vector_store %arg6[%c0_58, %c0_59, %c0_60], %71 {strides = array<i32>} : memref<1x8x1xf32, #tpu.memory_space<vmem>>, vector<1x8x1xf32>,
    return
  }
  func.func @transform_0(%arg0: i32) -> (i32, i32, i32) {
    %c0_i32 = arith.constant 0 : i32
    %c0_i32_0 = arith.constant 0 : i32
    %c0_i32_1 = arith.constant 0 : i32
    return %arg0, %c0_i32, %c0_i32_0 : i32, i32, i32
  }
  func.func @transform_1(%arg0: i32) -> (i32, i32, i32) {
    %c0_i32 = arith.constant 0 : i32
    %c0_i32_0 = arith.constant 0 : i32
    %c0_i32_1 = arith.constant 0 : i32
    %c0_i32_2 = arith.constant 0 : i32
    return %c0_i32, %c0_i32_0, %c0_i32_1 : i32, i32, i32
  }
  func.func @transform_2(%arg0: i32) -> (i32, i32) {
    %c0_i32 = arith.constant 0 : i32
    %c0_i32_0 = arith.constant 0 : i32
    %c0_i32_1 = arith.constant 0 : i32
    return %c0_i32, %c0_i32_0 : i32, i32
  }
  func.func @transform_3(%arg0: i32) -> (i32, i32, i32) {
    %c0_i32 = arith.constant 0 : i32
    %c0_i32_0 = arith.constant 0 : i32
    %c0_i32_1 = arith.constant 0 : i32
    return %arg0, %c0_i32, %c0_i32_0 : i32, i32, i32
  }
  func.func @transform_4(%arg0: i32) -> (i32, i32, i32) {
    %c0_i32 = arith.constant 0 : i32
    %c0_i32_0 = arith.constant 0 : i32
    %c0_i32_1 = arith.constant 0 : i32
    return %arg0, %c0_i32, %c0_i32_0 : i32, i32, i32
  }
  func.func @transform_5(%arg0: i32) -> (i32, i32, i32) {
    %c0_i32 = arith.constant 0 : i32
    %c0_i32_0 = arith.constant 0 : i32
    %c0_i32_1 = arith.constant 0 : i32
    return %arg0, %c0_i32, %c0_i32_0 : i32, i32, i32
  }
}

module attributes {stable_mosaic.version = 11 : i64} {
  func.func @_bn_act_kernel(%arg0: i32, %arg1: i32, %arg2: memref<1x8x8x18xf32, #tpu.memory_space<vmem>>, %arg3: memref<1x8x1x1xf32, #tpu.memory_space<vmem>>, %arg4: memref<1x8x1x1xf32, #tpu.memory_space<vmem>>, %arg5: memref<1x8x8x16xf32, #tpu.memory_space<vmem>>) attributes {dimension_semantics = [#tpu.dimension_semantics<parallel>, #tpu.dimension_semantics<parallel>], iteration_bounds = array<i64: 2, 2>, scalar_prefetch = 0 : i64, scratch_operands = 0 : i64, tpu.core_type = #tpu.core_type<tc>, window_params = [{transform_indices = @transform_0, window_bounds = array<i64: 1, 8, 8, 18>}, {pipeline_mode = #tpu.pipeline_mode<synchronous>, transform_indices = @transform_1, window_bounds = array<i64: 1, 8, 1, 1>}, {pipeline_mode = #tpu.pipeline_mode<synchronous>, transform_indices = @transform_2, window_bounds = array<i64: 1, 8, 1, 1>}, {transform_indices = @transform_3, window_bounds = array<i64: 1, 8, 8, 16>}]} {
    %c0 = arith.constant 0 : index
    %c0_0 = arith.constant 0 : index
    %c0_1 = arith.constant 0 : index
    %c0_2 = arith.constant 0 : index
    %0 = vector.load %arg2[%c0, %c0_0, %c0_1, %c0_2] : memref<1x8x8x18xf32, #tpu.memory_space<vmem>>, vector<1x8x8x18xf32>
    %1 = vector.extract_strided_slice %0 {offsets = [0, 0, 0, 0], sizes = [1, 8, 8, 16], strides = [1, 1, 1, 1]} : vector<1x8x8x18xf32> to vector<1x8x8x16xf32>
    %c0_3 = arith.constant 0 : index
    %c0_4 = arith.constant 0 : index
    %c0_5 = arith.constant 0 : index
    %c0_6 = arith.constant 0 : index
    %2 = vector.load %arg3[%c0_3, %c0_4, %c0_5, %c0_6] : memref<1x8x1x1xf32, #tpu.memory_space<vmem>>, vector<1x8x1x1xf32>
    %3 = vector.broadcast %2 : vector<1x8x1x1xf32> to vector<1x8x8x16xf32>
    %4 = arith.mulf %1, %3 : vector<1x8x8x16xf32>
    %c0_7 = arith.constant 0 : index
    %c0_8 = arith.constant 0 : index
    %c0_9 = arith.constant 0 : index
    %c0_10 = arith.constant 0 : index
    %5 = vector.load %arg4[%c0_7, %c0_8, %c0_9, %c0_10] : memref<1x8x1x1xf32, #tpu.memory_space<vmem>>, vector<1x8x1x1xf32>
    %6 = vector.broadcast %5 : vector<1x8x1x1xf32> to vector<1x8x8x16xf32>
    %7 = arith.addf %4, %6 : vector<1x8x8x16xf32>
    %cst = arith.constant 0.000000e+00 : f32
    %8 = vector.broadcast %cst : f32 to vector<1x8x8x16xf32>
    %9 = arith.cmpf ogt, %7, %8 : vector<1x8x8x16xf32>
    %cst_11 = arith.constant 1.000000e-01 : f32
    %10 = vector.broadcast %cst_11 : f32 to vector<1x8x8x16xf32>
    %11 = arith.mulf %10, %7 : vector<1x8x8x16xf32>
    %12 = arith.select %9, %7, %11 : vector<1x8x8x16xi1>, vector<1x8x8x16xf32>
    %c0_12 = arith.constant 0 : index
    %c0_13 = arith.constant 0 : index
    %c0_14 = arith.constant 0 : index
    %c0_15 = arith.constant 0 : index
    %13 = vector.load %arg5[%c0_12, %c0_13, %c0_14, %c0_15] : memref<1x8x8x16xf32, #tpu.memory_space<vmem>>, vector<1x8x8x16xf32>
    tpu.vector_store %arg5[%c0_12, %c0_13, %c0_14, %c0_15], %12 {strides = array<i32>} : memref<1x8x8x16xf32, #tpu.memory_space<vmem>>, vector<1x8x8x16xf32>,
    return
  }
  func.func @transform_0(%arg0: i32, %arg1: i32) -> (i32, i32, i32, i32) {
    %c0_i32 = arith.constant 0 : i32
    %c0_i32_0 = arith.constant 0 : i32
    %c0_i32_1 = arith.constant 0 : i32
    return %arg0, %c0_i32, %arg1, %c0_i32_0 : i32, i32, i32, i32
  }
  func.func @transform_1(%arg0: i32, %arg1: i32) -> (i32, i32, i32, i32) {
    %c0_i32 = arith.constant 0 : i32
    %c0_i32_0 = arith.constant 0 : i32
    %c0_i32_1 = arith.constant 0 : i32
    %c0_i32_2 = arith.constant 0 : i32
    %c0_i32_3 = arith.constant 0 : i32
    return %c0_i32, %c0_i32_0, %c0_i32_1, %c0_i32_2 : i32, i32, i32, i32
  }
  func.func @transform_2(%arg0: i32, %arg1: i32) -> (i32, i32, i32, i32) {
    %c0_i32 = arith.constant 0 : i32
    %c0_i32_0 = arith.constant 0 : i32
    %c0_i32_1 = arith.constant 0 : i32
    %c0_i32_2 = arith.constant 0 : i32
    %c0_i32_3 = arith.constant 0 : i32
    return %c0_i32, %c0_i32_0, %c0_i32_1, %c0_i32_2 : i32, i32, i32, i32
  }
  func.func @transform_3(%arg0: i32, %arg1: i32) -> (i32, i32, i32, i32) {
    %c0_i32 = arith.constant 0 : i32
    %c0_i32_0 = arith.constant 0 : i32
    %c0_i32_1 = arith.constant 0 : i32
    return %arg0, %c0_i32, %arg1, %c0_i32_0 : i32, i32, i32, i32
  }
}

</mosaic_0001>

<llo_original>
// kernel: cnn_block_forward.3
$region0: #{cnn_block_forward.3}
  #allocation0 [shape = 'u32[]', space=smem, size = 0x4, offset = 0x4, fixed_abs, tag = 'smem constant byte address 0x4 - core index']
  #allocation1 [shape = 'u32[72,128]{1,0:T(1,128)}', space=vmem, size = 0x9000, scoped, tag = 'internal scratch']
  %s0 = inlined_call_operand.vmem [shape: f32[2,8,16,18], index: 0, kind: input, shape index: {}]
  %s1 = inlined_call_operand.vmem [shape: f32[1,8,1,1], index: 1, kind: input, shape index: {}]
  %s2 = inlined_call_operand.vmem [shape: f32[1,8,1,1], index: 2, kind: input, shape index: {}]
  %s3 = inlined_call_operand.hbm [shape: f32[2,8,16,16], index: 3, kind: output, shape index: {}]
  %s4 = sld [smem:[#allocation0]]
  $region83: #{cnn_block_forward.3} parent=0
    _
  %s6 = ssub.s32 1, %s4
  %s7 = scalar_select 0, %s6, %s4
  $region1: #{cnn_block_forward.3} parent=0
    #allocation2 [shape = 'u8[65536]{0}', space=vmem, size = 0x10000, scoped, tag = 'input window, operand 0']
    #allocation3 [shape = 'u8[65536]{0}', space=vmem, size = 0x10000, scoped, tag = 'output window, operand 0']
    #allocation4 [shape = 's32[2]{0}', space=sflag, size = 0x8, scoped, tag = 'scoped memory for cnn_block_forward.3']
    %8 = vsyncpa [#allocation4], 0
    %s9 = scalar_lea.sflag [#allocation4], 1
    %10 = vsyncpa %s9, 0
    loop: start=0, step=1, limit=6
    $region2: #{cnn_block_forward.3} parent=1 // loop_pre_header
      _
    $region3: #{cnn_block_forward.3} parent=1 // loop_header
      %s12 = sphi 0, %s16
      %p13 = scmp.ge.s32.totalorder %s12, 6
      %s19 = sphi 0, %s31
      %s20 = sphi 0, %s27
      %s21 = sphi 0, %s19
      %s22 = sphi 0, %s20
      %s23 = sphi 0, %s21
      %s24 = sphi 0, %s22
      %s36 = sphi 0, %s38
      %s39 = sphi 0, %s36
      %s40 = sphi 0, %s39
      %s56 = sphi 0, %s40
      %s60 = sphi 0, %s60
      %s62 = sphi 0, %s60
      %s63 = sphi 0, %s62
      %s77 = sphi 0, %s63
      %s81 = sphi 0, %s81
      %s83 = sphi 0, %s81
      %s84 = sphi 0, %s83
      %s98 = sphi 0, %s84
      %s106 = sphi 0, %s108
      %s109 = sphi 0, %s106
      %s110 = sphi 0, %s109
      %s126 = sphi 0, %s110
    $region4: #{cnn_block_forward.3} parent=1 // loop_header_branch
      %15 = sbr.rel (%p13) target = $region8
    $region5: #{cnn_block_forward.3} parent=1 // loop_body
      %s17 = ssub.s32 %s12, 1
      %s18 = ssub.s32 %s12, 2
      %s25 = sadd.s32 1, %s20
      %p26 = scmp.ge.s32.totalorder %s25, 2
      %s27 = scalar_select %p26, 0, %s25
      %s28 = sadd.s32 1, %s19
      %s29 = scalar_select %p26, %s28, %s19
      %p30 = scmp.ge.s32.totalorder %s29, 2
      %s31 = scalar_select %p30, 0, %s29
      %s32 = ssub.s32 %s19, %s31
      %s33 = ssub.s32 %s20, %s27
      %s34 = sor.u32 %s32, %s33
      %p35 = scmp.eq.s32.totalorder %s34, 0
      %s37 = sadd.s32 %s36, 1
      %s38 = scalar_select %p35, %s36, %s37
      %p41 = pneg %p35
      %p42 = scmp.eq.s32.totalorder %s12, 3
      %p43 = por %p41, %p42
      %p44 = scmp.ne.s32.totalorder %s36, %s39
      %p45 = scmp.eq.s32.totalorder %s12, 0
      %p46 = por %p44, %p45
      %p47 = scmp.ne.s32.totalorder %s36, %s39
      %p48 = scmp.eq.s32.totalorder %s17, 3
      %p49 = por %p47, %p48
      %p50 = scmp.ne.s32.totalorder %s39, %s40
      %p51 = scmp.eq.s32.totalorder %s17, 0
      %p52 = por %p50, %p51
      %p53 = scmp.ne.s32.totalorder %s39, %s40
      %p54 = scmp.eq.s32.totalorder %s18, 3
      %p55 = por %p53, %p54
      %p57 = scmp.ne.s32.totalorder %s40, %s56
      %p58 = scmp.eq.s32.totalorder %s18, 0
      %p59 = por %p57, %p58
      %s61 = sadd.s32 %s60, 1
      %p64 = scmp.eq.s32.totalorder %s12, 3
      %p65 = scmp.ne.s32.totalorder %s60, %s62
      %p66 = scmp.eq.s32.totalorder %s12, 0
      %p67 = por %p65, %p66
      %p68 = scmp.ne.s32.totalorder %s60, %s62
      %p69 = scmp.eq.s32.totalorder %s17, 3
      %p70 = por %p68, %p69
      %p71 = scmp.ne.s32.totalorder %s62, %s63
      %p72 = scmp.eq.s32.totalorder %s17, 0
      %p73 = por %p71, %p72
      %p74 = scmp.ne.s32.totalorder %s62, %s63
      %p75 = scmp.eq.s32.totalorder %s18, 3
      %p76 = por %p74, %p75
      %p78 = scmp.ne.s32.totalorder %s63, %s77
      %p79 = scmp.eq.s32.totalorder %s18, 0
      %p80 = por %p78, %p79
      %s82 = sadd.s32 %s81, 1
      %p85 = scmp.eq.s32.totalorder %s12, 3
      %p86 = scmp.ne.s32.totalorder %s81, %s83
      %p87 = scmp.eq.s32.totalorder %s12, 0
      %p88 = por %p86, %p87
      %p89 = scmp.ne.s32.totalorder %s81, %s83
      %p90 = scmp.eq.s32.totalorder %s17, 3
      %p91 = por %p89, %p90
      %p92 = scmp.ne.s32.totalorder %s83, %s84
      %p93 = scmp.eq.s32.totalorder %s17, 0
      %p94 = por %p92, %p93
      %p95 = scmp.ne.s32.totalorder %s83, %s84
      %p96 = scmp.eq.s32.totalorder %s18, 3
      %p97 = por %p95, %p96
      %p99 = scmp.ne.s32.totalorder %s84, %s98
      %p100 = scmp.eq.s32.totalorder %s18, 0
      %p101 = por %p99, %p100
      %s102 = ssub.s32 %s19, %s31
      %s103 = ssub.s32 %s20, %s27
      %s104 = sor.u32 %s102, %s103
      %p105 = scmp.eq.s32.totalorder %s104, 0
      %s107 = sadd.s32 %s106, 1
      %s108 = scalar_select %p105, %s106, %s107
      %p111 = pneg %p105
      %p112 = scmp.eq.s32.totalorder %s12, 3
      %p113 = por %p111, %p112
      %p114 = scmp.ne.s32.totalorder %s106, %s109
      %p115 = scmp.eq.s32.totalorder %s12, 0
      %p116 = por %p114, %p115
      %p117 = scmp.ne.s32.totalorder %s106, %s109
      %p118 = scmp.eq.s32.totalorder %s17, 3
      %p119 = por %p117, %p118
      %p120 = scmp.ne.s32.totalorder %s109, %s110
      %p121 = scmp.eq.s32.totalorder %s17, 0
      %p122 = por %p120, %p121
      %p123 = scmp.ne.s32.totalorder %s109, %s110
      %p124 = scmp.eq.s32.totalorder %s18, 3
      %p125 = por %p123, %p124
      %p127 = scmp.ne.s32.totalorder %s110, %s126
      %p128 = scmp.eq.s32.totalorder %s18, 0
      %p129 = por %p127, %p128
      %p130 = scmp.le.s32.totalorder 1, %s12
      %p131 = scmp.lt.s32.totalorder %s12, 5
      %p132 = pnand %p130, %p131
      %p133 = pneg %p132
      // Predicated region
      $region9: #{cnn_block_forward.3} parent=5 // pred_check
        _
      $region10: #{cnn_block_forward.3} parent=5 // pred_check_branch
        %135 = sbr.rel (%p132) target = $region12
      $region11: #{cnn_block_forward.3} parent=5 // pred_region
        %s136 = ssub.s32 %s12, 1
        // Predicated region
        $region13: #{cnn_block_forward.3} parent=11 // pred_check
          %p137 = pneg %p73
        $region14: #{cnn_block_forward.3} parent=11 // pred_check_branch
          %139 = sbr.rel (%p137) target = $region16
        $region15: #{cnn_block_forward.3} parent=11 // pred_region
          _
        $region16: #{cnn_block_forward.3} parent=11 // pred_fallthru
          _
        // Predicated region
        $region17: #{cnn_block_forward.3} parent=11 // pred_check
          %p140 = pneg %p94
        $region18: #{cnn_block_forward.3} parent=11 // pred_check_branch
          %142 = sbr.rel (%p140) target = $region20
        $region19: #{cnn_block_forward.3} parent=11 // pred_region
          _
        $region20: #{cnn_block_forward.3} parent=11 // pred_fallthru
          _
      $region12: #{cnn_block_forward.3} parent=5 // pred_fallthru
        _
      %p143 = scmp.lt.s32.totalorder %s12, 4
      // Predicated region
      $region21: #{cnn_block_forward.3} parent=5 // pred_check
        %p144 = pneg %p143
      $region22: #{cnn_block_forward.3} parent=5 // pred_check_branch
        %146 = sbr.rel (%p144) target = $region24
      $region23: #{cnn_block_forward.3} parent=5 // pred_region
        // Predicated region
        $region25: #{cnn_block_forward.3} parent=23 // pred_check
          %p147 = pneg %p46
        $region26: #{cnn_block_forward.3} parent=23 // pred_check_branch
          %149 = sbr.rel (%p147) target = $region28
        $region27: #{cnn_block_forward.3} parent=23 // pred_region
          %s150 = sand.u32 %s36, 1
          %s151 = sand.u32 %s36, 1
          %s152 = smul.addr %s151, 64
          %s153 = scalar_lea.vmem [#allocation2], %s152
          %s154 = smul.addr %s19, 16
          %s155 = sadd.s32 %s20, %s154
          %s156 = smul.addr %s155, 8
          %s157 = scalar_lea.vmem %s0, %s156
          // Predicated region
          $region29: #{cnn_block_forward.3} parent=27 // pred_check
            _
          $region30: #{cnn_block_forward.3} parent=27 // pred_check_branch
            %159 = sbr.rel (0) target = $region32
          $region31: #{cnn_block_forward.3} parent=27 // pred_region
            // Predicated region
            $region33: #{cnn_block_forward.3} parent=31 // pred_check
              _
            $region34: #{cnn_block_forward.3} parent=31 // pred_check_branch
              %161 = sbr.rel (0) target = $region36
            $region35: #{cnn_block_forward.3} parent=31 // pred_region
              // Predicated region
              $region48: #{cnn_block_forward.3} parent=35 // pred_check
                _
              $region49: #{cnn_block_forward.3} parent=35 // pred_check_branch
                %191 = sbr.rel (0) target = $region51
              $region50: #{cnn_block_forward.3} parent=35 // pred_region
                loop: start=0, step=1, limit=1
                $region52: #{cnn_block_forward.3} parent=50 // loop_pre_header
                  _
                $region53: #{cnn_block_forward.3} parent=50 // loop_header
                  %s193 = sphi 0, %s197
                  %p194 = scmp.ge.s32.totalorder %s193, 1
                  %s198 = sphi %s157, %s157
                  %s199 = sphi %s153, %s153
                $region54: #{cnn_block_forward.3} parent=50 // loop_header_branch
                  %196 = sbr.rel (%p194) target = $region58
                $region55: #{cnn_block_forward.3} parent=50 // loop_body
                  %v200 = vld [vmem:[%s198] sm:$0xff]
                  %201 = vst [vmem:[%s199] sm:$0xff] %v200
                  %v202 = vld [vmem:[%s198 + $0x10] sm:$0xff]
                  %203 = vst [vmem:[%s199 + $0x8] sm:$0xff] %v202
                  %v204 = vld [vmem:[%s198 + $0x20] sm:$0xff]
                  %205 = vst [vmem:[%s199 + $0x10] sm:$0xff] %v204
                  %v206 = vld [vmem:[%s198 + $0x30] sm:$0xff]
                  %207 = vst [vmem:[%s199 + $0x18] sm:$0xff] %v206
                  %v208 = vld [vmem:[%s198 + $0x40] sm:$0xff]
                  %209 = vst [vmem:[%s199 + $0x20] sm:$0xff] %v208
                  %v210 = vld [vmem:[%s198 + $0x50] sm:$0xff]
                  %211 = vst [vmem:[%s199 + $0x28] sm:$0xff] %v210
                  %v212 = vld [vmem:[%s198 + $0x60] sm:$0xff]
                  %213 = vst [vmem:[%s199 + $0x30] sm:$0xff] %v212
                  %v214 = vld [vmem:[%s198 + $0x70] sm:$0xff]
                  %215 = vst [vmem:[%s199 + $0x38] sm:$0xff] %v214
                $region56: #{cnn_block_forward.3} parent=50 // loop_footer
                  %s197 = sadd.s32 1, %s193
                $region57: #{cnn_block_forward.3} parent=50 // loop_footer_branch
                  %192 = sbr.rel target = $region53
                $region58: #{cnn_block_forward.3} parent=50 // loop_exit
                  _
              $region51: #{cnn_block_forward.3} parent=35 // pred_fallthru
                _
              // Predicated region
              $region59: #{cnn_block_forward.3} parent=35 // pred_check
                _
              $region60: #{cnn_block_forward.3} parent=35 // pred_check_branch
                %217 = sbr.rel target = $region62
              $region61: #{cnn_block_forward.3} parent=35 // pred_region
                _
              $region62: #{cnn_block_forward.3} parent=35 // pred_fallthru
                _
            $region36: #{cnn_block_forward.3} parent=31 // pred_fallthru
              _
            // Predicated region
            $region37: #{cnn_block_forward.3} parent=31 // pred_check
              _
            $region38: #{cnn_block_forward.3} parent=31 // pred_check_branch
              %163 = sbr.rel target = $region40
            $region39: #{cnn_block_forward.3} parent=31 // pred_region
              %s165 = ssub.s32 256, 1
              loop: start=0, step=1, limit=1
              $region41: #{cnn_block_forward.3} parent=39 // loop_pre_header
                _
              $region42: #{cnn_block_forward.3} parent=39 // loop_header
                %s167 = sphi 0, %s171
                %p168 = scmp.ge.s32.totalorder %s167, 1
                %s172 = sphi %s157, %s157
                %s173 = sphi %s153, %s153
              $region43: #{cnn_block_forward.3} parent=39 // loop_header_branch
                %170 = sbr.rel (%p168) target = $region47
              $region44: #{cnn_block_forward.3} parent=39 // loop_body
                %v174 = vld [vmem:[%s172] sm:%s165]
                %175 = vst [vmem:[%s173] sm:%s165] %v174
                %v176 = vld [vmem:[%s172 + $0x10] sm:%s165]
                %177 = vst [vmem:[%s173 + $0x8] sm:%s165] %v176
                %v178 = vld [vmem:[%s172 + $0x20] sm:%s165]
                %179 = vst [vmem:[%s173 + $0x10] sm:%s165] %v178
                %v180 = vld [vmem:[%s172 + $0x30] sm:%s165]
                %181 = vst [vmem:[%s173 + $0x18] sm:%s165] %v180
                %v182 = vld [vmem:[%s172 + $0x40] sm:%s165]
                %183 = vst [vmem:[%s173 + $0x20] sm:%s165] %v182
                %v184 = vld [vmem:[%s172 + $0x50] sm:%s165]
                %185 = vst [vmem:[%s173 + $0x28] sm:%s165] %v184
                %v186 = vld [vmem:[%s172 + $0x60] sm:%s165]
                %187 = vst [vmem:[%s173 + $0x30] sm:%s165] %v186
                %v188 = vld [vmem:[%s172 + $0x70] sm:%s165]
                %189 = vst [vmem:[%s173 + $0x38] sm:%s165] %v188
              $region45: #{cnn_block_forward.3} parent=39 // loop_footer
                %s171 = sadd.s32 1, %s167
              $region46: #{cnn_block_forward.3} parent=39 // loop_footer_branch
                %166 = sbr.rel target = $region42
              $region47: #{cnn_block_forward.3} parent=39 // loop_exit
                _
            $region40: #{cnn_block_forward.3} parent=31 // pred_fallthru
              _
          $region32: #{cnn_block_forward.3} parent=27 // pred_fallthru
            _
          %218 = vnop
        $region28: #{cnn_block_forward.3} parent=23 // pred_fallthru
          _
      $region24: #{cnn_block_forward.3} parent=5 // pred_fallthru
        _
      %p219 = scmp.le.s32.totalorder 1, %s12
      %p220 = scmp.lt.s32.totalorder %s12, 5
      %p221 = pnand %p219, %p220
      %p222 = pneg %p221
      // Predicated region
      $region63: #{cnn_block_forward.3} parent=5 // pred_check
        _
      $region64: #{cnn_block_forward.3} parent=5 // pred_check_branch
        %224 = sbr.rel (%p221) target = $region66
      $region65: #{cnn_block_forward.3} parent=5 // pred_region
        %s225 = ssub.s32 %s12, 1
        %s226 = sand.u32 %s39, 1
        %s227 = sand.u32 %s39, 1
        %s228 = smul.addr %s227, 64
        %s229 = scalar_lea.vmem [#allocation2], %s228
        // Predicated region
        $region67: #{cnn_block_forward.3} parent=65 // pred_check
          %p230 = pneg %p52
        $region68: #{cnn_block_forward.3} parent=65 // pred_check_branch
          %232 = sbr.rel (%p230) target = $region70
        $region69: #{cnn_block_forward.3} parent=65 // pred_region
          _
        $region70: #{cnn_block_forward.3} parent=65 // pred_fallthru
          _
        %s233 = sand.u32 %s39, 1
        %s234 = sand.u32 %s39, 1
        %s235 = smul.addr %s234, 64
        %s236 = scalar_lea.vmem [#allocation2], %s235
        %p237 = pneg %p52
        %p238 = pneg %p49
        %p239 = pneg %p73
        %p240 = pneg %p70
        %p241 = pneg %p94
        %p242 = pneg %p91
        %p243 = pneg %p122
        %p244 = pneg %p119
        %s245 = sand.u32 %s109, 1
        %s246 = scalar_lea.sflag [#allocation4], %s245
        %s247 = sand.u32 %s109, 1
        %s248 = smul.addr %s247, 64
        %s249 = scalar_lea.vmem [#allocation3], %s248
        %v250 = vld [vmem:[%s229] sm:$0xff]
        %v251 = vld [vmem:[%s229 + $0x8] sm:$0xff]
        %v252 = vld [vmem:[%s229 + $0x10] sm:$0xff]
        %v253 = vld [vmem:[%s229 + $0x18] sm:$0xff]
        %v254 = vld [vmem:[%s229 + $0x20] sm:$0xff]
        %v255 = vld [vmem:[%s229 + $0x28] sm:$0xff]
        %v256 = vld [vmem:[%s229 + $0x30] sm:$0xff]
        %v257 = vld [vmem:[%s229 + $0x38] sm:$0xff]
        %v258 = vld [vmem:[%s1] sm:$0x1]
        %v259 = vld [vmem:[%s1 + $0x1] sm:$0x1]
        %v260 = vld [vmem:[%s1 + $0x2] sm:$0x1]
        %v261 = vld [vmem:[%s1 + $0x3] sm:$0x1]
        %v262 = vld [vmem:[%s1 + $0x4] sm:$0x1]
        %v263 = vld [vmem:[%s1 + $0x5] sm:$0x1]
        %v264 = vld [vmem:[%s1 + $0x6] sm:$0x1]
        %v265 = vld [vmem:[%s1 + $0x7] sm:$0x1]
        %v274 = vperm.slane %v258, 0
        %v275 = vperm.slane %v259, 0
        %v276 = vperm.slane %v260, 0
        %v277 = vperm.slane %v261, 0
        %v278 = vperm.slane %v262, 0
        %v279 = vperm.slane %v263, 0
        %v280 = vperm.slane %v264, 0
        %v281 = vperm.slane %v265, 0
        %282 = vset.pattern.permute.xlu0 0
        %283 = vperm.xlu0 %282, %v274
        %v284 = vpop.permute.xlu0 %283
        %286 = vset.pattern.permute.xlu0 0
        %287 = vperm.xlu0 %286, %v275
        %v288 = vpop.permute.xlu0 %287
        %290 = vset.pattern.permute.xlu0 0
        %291 = vperm.xlu0 %290, %v276
        %v292 = vpop.permute.xlu0 %291
        %294 = vset.pattern.permute.xlu0 0
        %295 = vperm.xlu0 %294, %v277
        %v296 = vpop.permute.xlu0 %295
        %298 = vset.pattern.permute.xlu0 0
        %299 = vperm.xlu0 %298, %v278
        %v300 = vpop.permute.xlu0 %299
        %302 = vset.pattern.permute.xlu0 0
        %303 = vperm.xlu0 %302, %v279
        %v304 = vpop.permute.xlu0 %303
        %306 = vset.pattern.permute.xlu0 0
        %307 = vperm.xlu0 %306, %v280
        %v308 = vpop.permute.xlu0 %307
        %310 = vset.pattern.permute.xlu0 0
        %311 = vperm.xlu0 %310, %v281
        %v312 = vpop.permute.xlu0 %311
        %v314 = vmul.f32 %v250, %v284
        %v315 = vmul.f32 %v251, %v288
        %v316 = vmul.f32 %v252, %v292
        %v317 = vmul.f32 %v253, %v296
        %v318 = vmul.f32 %v254, %v300
        %v319 = vmul.f32 %v255, %v304
        %v320 = vmul.f32 %v256, %v308
        %v321 = vmul.f32 %v257, %v312
        %v322 = vld [vmem:[%s2] sm:$0x1]
        %v323 = vld [vmem:[%s2 + $0x1] sm:$0x1]
        %v324 = vld [vmem:[%s2 + $0x2] sm:$0x1]
        %v325 = vld [vmem:[%s2 + $0x3] sm:$0x1]
        %v326 = vld [vmem:[%s2 + $0x4] sm:$0x1]
        %v327 = vld [vmem:[%s2 + $0x5] sm:$0x1]
        %v328 = vld [vmem:[%s2 + $0x6] sm:$0x1]
        %v329 = vld [vmem:[%s2 + $0x7] sm:$0x1]
        %v338 = vperm.slane %v322, 0
        %v339 = vperm.slane %v323, 0
        %v340 = vperm.slane %v324, 0
        %v341 = vperm.slane %v325, 0
        %v342 = vperm.slane %v326, 0
        %v343 = vperm.slane %v327, 0
        %v344 = vperm.slane %v328, 0
        %v345 = vperm.slane %v329, 0
        %346 = vset.pattern.permute.xlu0 0
        %347 = vperm.xlu0 %346, %v338
        %v348 = vpop.permute.xlu0 %347
        %350 = vset.pattern.permute.xlu0 0
        %351 = vperm.xlu0 %350, %v339
        %v352 = vpop.permute.xlu0 %351
        %354 = vset.pattern.permute.xlu0 0
        %355 = vperm.xlu0 %354, %v340
        %v356 = vpop.permute.xlu0 %355
        %358 = vset.pattern.permute.xlu0 0
        %359 = vperm.xlu0 %358, %v341
        %v360 = vpop.permute.xlu0 %359
        %362 = vset.pattern.permute.xlu0 0
        %363 = vperm.xlu0 %362, %v342
        %v364 = vpop.permute.xlu0 %363
        %366 = vset.pattern.permute.xlu0 0
        %367 = vperm.xlu0 %366, %v343
        %v368 = vpop.permute.xlu0 %367
        %370 = vset.pattern.permute.xlu0 0
        %371 = vperm.xlu0 %370, %v344
        %v372 = vpop.permute.xlu0 %371
        %374 = vset.pattern.permute.xlu0 0
        %375 = vperm.xlu0 %374, %v345
        %v376 = vpop.permute.xlu0 %375
        %v378 = vadd.f32 %v314, %v348
        %v379 = vadd.f32 %v315, %v352
        %v380 = vadd.f32 %v316, %v356
        %v381 = vadd.f32 %v317, %v360
        %v382 = vadd.f32 %v318, %v364
        %v383 = vadd.f32 %v319, %v368
        %v384 = vadd.f32 %v320, %v372
        %v385 = vadd.f32 %v321, %v376
        %vm386 = vcmp.gt.f32.partialorder %v378, 0.0
        %vm387 = vcmp.gt.f32.partialorder %v379, 0.0
        %vm388 = vcmp.gt.f32.partialorder %v380, 0.0
        %vm389 = vcmp.gt.f32.partialorder %v381, 0.0
        %vm390 = vcmp.gt.f32.partialorder %v382, 0.0
        %vm391 = vcmp.gt.f32.partialorder %v383, 0.0
        %vm392 = vcmp.gt.f32.partialorder %v384, 0.0
        %vm393 = vcmp.gt.f32.partialorder %v385, 0.0
        %v394 = vmul.f32 %v378, 0.1
        %v395 = vmul.f32 %v379, 0.1
        %v396 = vmul.f32 %v380, 0.1
        %v397 = vmul.f32 %v381, 0.1
        %v398 = vmul.f32 %v382, 0.1
        %v399 = vmul.f32 %v383, 0.1
        %v400 = vmul.f32 %v384, 0.1
        %v401 = vmul.f32 %v385, 0.1
        %v402 = vsel %vm386, %v378, %v394
        %v403 = vsel %vm387, %v379, %v395
        %v404 = vsel %vm388, %v380, %v396
        %v405 = vsel %vm389, %v381, %v397
        %v406 = vsel %vm390, %v382, %v398
        %v407 = vsel %vm391, %v383, %v399
        %v408 = vsel %vm392, %v384, %v400
        %v409 = vsel %vm393, %v385, %v401
        %vm410 = vcmask 130048
        %411 = vst.msk [vmem:[%s249] sm:$0xff] %vm410, %v402
        %412 = vst.msk [vmem:[%s249 + $0x8] sm:$0xff] %vm410, %v403
        %413 = vst.msk [vmem:[%s249 + $0x10] sm:$0xff] %vm410, %v404
        %414 = vst.msk [vmem:[%s249 + $0x18] sm:$0xff] %vm410, %v405
        %415 = vst.msk [vmem:[%s249 + $0x20] sm:$0xff] %vm410, %v406
        %416 = vst.msk [vmem:[%s249 + $0x28] sm:$0xff] %vm410, %v407
        %417 = vst.msk [vmem:[%s249 + $0x30] sm:$0xff] %vm410, %v408
        %418 = vst.msk [vmem:[%s249 + $0x38] sm:$0xff] %vm410, %v409
        %s419 = sand.u32 %s109, 1
        %s420 = scalar_lea.sflag [#allocation4], %s419
        %s421 = sand.u32 %s109, 1
        %s422 = smul.addr %s421, 64
        %s423 = scalar_lea.vmem [#allocation3], %s422
        // Predicated region
        $region71: #{cnn_block_forward.3} parent=65 // pred_check
          %p424 = pneg %p119
        $region72: #{cnn_block_forward.3} parent=65 // pred_check_branch
          %426 = sbr.rel (%p424) target = $region74
        $region73: #{cnn_block_forward.3} parent=65 // pred_region
          %428 = vsyncadd %s420, 0
          %s429 = smul.addr %s21, 16
          %s430 = sadd.s32 %s22, %s429
          %s431 = smul.addr %s430, 8
          %s432 = scalar_lea.hbm %s3, %s431
          %s433 = sshll.u32 %s423, 4
          %s434 = int_to_ptr.vmem [resolvable:$true] %s433
          %s435 = sshll.u32 %s432, 4
          %s436 = int_to_ptr.hbm [resolvable:$true] %s435
          %441 = dma.vmem_to_hbm [thread:$0]  %s434, 1024, %s436, %s420, 128, 256, 8
        $region74: #{cnn_block_forward.3} parent=65 // pred_fallthru
          _
      $region66: #{cnn_block_forward.3} parent=5 // pred_fallthru
        _
      %p442 = scmp.le.s32.totalorder 2, %s12
      // Predicated region
      $region75: #{cnn_block_forward.3} parent=5 // pred_check
        %p443 = pneg %p442
      $region76: #{cnn_block_forward.3} parent=5 // pred_check_branch
        %445 = sbr.rel (%p443) target = $region78
      $region77: #{cnn_block_forward.3} parent=5 // pred_region
        %s446 = ssub.s32 %s12, 2
        // Predicated region
        $region79: #{cnn_block_forward.3} parent=77 // pred_check
          %p447 = pneg %p125
        $region80: #{cnn_block_forward.3} parent=77 // pred_check_branch
          %449 = sbr.rel (%p447) target = $region82
        $region81: #{cnn_block_forward.3} parent=77 // pred_region
          %s450 = sand.u32 %s110, 1
          %s451 = scalar_lea.sflag [#allocation4], %s450
          %s452 = sand.u32 %s110, 1
          %s453 = smul.addr %s452, 64
          %s454 = scalar_lea.vmem [#allocation3], %s453
          %456 = dma.done %s451, 1024
        $region82: #{cnn_block_forward.3} parent=77 // pred_fallthru
          _
      $region78: #{cnn_block_forward.3} parent=5 // pred_fallthru
        _
    $region6: #{cnn_block_forward.3} parent=1 // loop_footer
      %s16 = sadd.s32 1, %s12
    $region7: #{cnn_block_forward.3} parent=1 // loop_footer_branch
      %11 = sbr.rel target = $region3
    $region8: #{cnn_block_forward.3} parent=1 // loop_exit
      _
    %457 = vsyncpa [#allocation4], 1
    %s458 = scalar_lea.sflag [#allocation4], 1
    %459 = vsyncpa %s458, 1

// kernel: cnn_block_forward.2
$region0: #{cnn_block_forward.2}
  #allocation0 [shape = 'u32[]', space=smem, size = 0x4, offset = 0x4, fixed_abs, tag = 'smem constant byte address 0x4 - core index']
  #allocation1 [shape = 'u32[72,128]{1,0:T(1,128)}', space=vmem, size = 0x9000, scoped, tag = 'internal scratch']
  %s0 = inlined_call_operand.vmem [shape: bf16[2,8,384], index: 0, kind: input, shape index: {}]
  %s1 = inlined_call_operand.vmem [shape: bf16[9,8,8], index: 1, kind: input, shape index: {}]
  %s2 = inlined_call_operand.vmem [shape: f32[1,288], index: 2, kind: input, shape index: {}]
  %s3 = inlined_call_operand.vmem [shape: f32[2,8,288], index: 3, kind: output, shape index: {0}]
  %s4 = inlined_call_operand.vmem [shape: f32[2,8,1], index: 4, kind: output, shape index: {1}]
  %s5 = inlined_call_operand.vmem [shape: f32[2,8,1], index: 5, kind: output, shape index: {2}]
  %6 = xla_tuple %s3, %s4, %s5
  %s7 = sld [smem:[#allocation0]]
  $region61: #{cnn_block_forward.2} parent=0
    _
  %s9 = ssub.s32 1, %s7
  %s10 = scalar_select 0, %s9, %s7
  loop: start=0, step=1, limit=4
  $region2: #{cnn_block_forward.2} parent=0 // loop_pre_header
    _
  $region3: #{cnn_block_forward.2} parent=0 // loop_header
    %s12 = sphi 0, %s16
    %p13 = scmp.ge.s32.totalorder %s12, 4
    %s22 = sphi 0, %s24
    %s25 = sphi 0, %s22
    %s26 = sphi 0, %s25
    %s42 = sphi 0, %s26
    %s46 = sphi 0, %s46
    %s48 = sphi 0, %s46
    %s49 = sphi 0, %s48
    %s63 = sphi 0, %s49
    %s67 = sphi 0, %s67
    %s69 = sphi 0, %s67
    %s70 = sphi 0, %s69
    %s84 = sphi 0, %s70
    %s90 = sphi 0, %s92
    %s93 = sphi 0, %s90
    %s94 = sphi 0, %s93
    %s110 = sphi 0, %s94
    %s116 = sphi 0, %s118
    %s119 = sphi 0, %s116
    %s120 = sphi 0, %s119
    %s136 = sphi 0, %s120
    %s142 = sphi 0, %s144
    %s145 = sphi 0, %s142
    %s146 = sphi 0, %s145
    %s162 = sphi 0, %s146
  $region4: #{cnn_block_forward.2} parent=0 // loop_header_branch
    %15 = sbr.rel (%p13) target = $region8
  $region5: #{cnn_block_forward.2} parent=0 // loop_body
    %s17 = ssub.s32 %s12, 1
    %s18 = ssub.s32 %s12, 2
    %s19 = sadd.s32 %s12, 1
    %s20 = ssub.s32 %s12, %s19
    %p21 = scmp.eq.s32.totalorder %s20, 0
    %s23 = sadd.s32 %s22, 1
    %s24 = scalar_select %p21, %s22, %s23
    %p27 = pneg %p21
    %p28 = scmp.eq.s32.totalorder %s12, 1
    %p29 = por %p27, %p28
    %p30 = scmp.ne.s32.totalorder %s22, %s25
    %p31 = scmp.eq.s32.totalorder %s12, 0
    %p32 = por %p30, %p31
    %p33 = scmp.ne.s32.totalorder %s22, %s25
    %p34 = scmp.eq.s32.totalorder %s17, 1
    %p35 = por %p33, %p34
    %p36 = scmp.ne.s32.totalorder %s25, %s26
    %p37 = scmp.eq.s32.totalorder %s17, 0
    %p38 = por %p36, %p37
    %p39 = scmp.ne.s32.totalorder %s25, %s26
    %p40 = scmp.eq.s32.totalorder %s18, 1
    %p41 = por %p39, %p40
    %p43 = scmp.ne.s32.totalorder %s26, %s42
    %p44 = scmp.eq.s32.totalorder %s18, 0
    %p45 = por %p43, %p44
    %s47 = sadd.s32 %s46, 1
    %p50 = scmp.eq.s32.totalorder %s12, 1
    %p51 = scmp.ne.s32.totalorder %s46, %s48
    %p52 = scmp.eq.s32.totalorder %s12, 0
    %p53 = por %p51, %p52
    %p54 = scmp.ne.s32.totalorder %s46, %s48
    %p55 = scmp.eq.s32.totalorder %s17, 1
    %p56 = por %p54, %p55
    %p57 = scmp.ne.s32.totalorder %s48, %s49
    %p58 = scmp.eq.s32.totalorder %s17, 0
    %p59 = por %p57, %p58
    %p60 = scmp.ne.s32.totalorder %s48, %s49
    %p61 = scmp.eq.s32.totalorder %s18, 1
    %p62 = por %p60, %p61
    %p64 = scmp.ne.s32.totalorder %s49, %s63
    %p65 = scmp.eq.s32.totalorder %s18, 0
    %p66 = por %p64, %p65
    %s68 = sadd.s32 %s67, 1
    %p71 = scmp.eq.s32.totalorder %s12, 1
    %p72 = scmp.ne.s32.totalorder %s67, %s69
    %p73 = scmp.eq.s32.totalorder %s12, 0
    %p74 = por %p72, %p73
    %p75 = scmp.ne.s32.totalorder %s67, %s69
    %p76 = scmp.eq.s32.totalorder %s17, 1
    %p77 = por %p75, %p76
    %p78 = scmp.ne.s32.totalorder %s69, %s70
    %p79 = scmp.eq.s32.totalorder %s17, 0
    %p80 = por %p78, %p79
    %p81 = scmp.ne.s32.totalorder %s69, %s70
    %p82 = scmp.eq.s32.totalorder %s18, 1
    %p83 = por %p81, %p82
    %p85 = scmp.ne.s32.totalorder %s70, %s84
    %p86 = scmp.eq.s32.totalorder %s18, 0
    %p87 = por %p85, %p86
    %s88 = ssub.s32 %s12, %s19
    %p89 = scmp.eq.s32.totalorder %s88, 0
    %s91 = sadd.s32 %s90, 1
    %s92 = scalar_select %p89, %s90, %s91
    %p95 = pneg %p89
    %p96 = scmp.eq.s32.totalorder %s12, 1
    %p97 = por %p95, %p96
    %p98 = scmp.ne.s32.totalorder %s90, %s93
    %p99 = scmp.eq.s32.totalorder %s12, 0
    %p100 = por %p98, %p99
    %p101 = scmp.ne.s32.totalorder %s90, %s93
    %p102 = scmp.eq.s32.totalorder %s17, 1
    %p103 = por %p101, %p102
    %p104 = scmp.ne.s32.totalorder %s93, %s94
    %p105 = scmp.eq.s32.totalorder %s17, 0
    %p106 = por %p104, %p105
    %p107 = scmp.ne.s32.totalorder %s93, %s94
    %p108 = scmp.eq.s32.totalorder %s18, 1
    %p109 = por %p107, %p108
    %p111 = scmp.ne.s32.totalorder %s94, %s110
    %p112 = scmp.eq.s32.totalorder %s18, 0
    %p113 = por %p111, %p112
    %s114 = ssub.s32 %s12, %s19
    %p115 = scmp.eq.s32.totalorder %s114, 0
    %s117 = sadd.s32 %s116, 1
    %s118 = scalar_select %p115, %s116, %s117
    %p121 = pneg %p115
    %p122 = scmp.eq.s32.totalorder %s12, 1
    %p123 = por %p121, %p122
    %p124 = scmp.ne.s32.totalorder %s116, %s119
    %p125 = scmp.eq.s32.totalorder %s12, 0
    %p126 = por %p124, %p125
    %p127 = scmp.ne.s32.totalorder %s116, %s119
    %p128 = scmp.eq.s32.totalorder %s17, 1
    %p129 = por %p127, %p128
    %p130 = scmp.ne.s32.totalorder %s119, %s120
    %p131 = scmp.eq.s32.totalorder %s17, 0
    %p132 = por %p130, %p131
    %p133 = scmp.ne.s32.totalorder %s119, %s120
    %p134 = scmp.eq.s32.totalorder %s18, 1
    %p135 = por %p133, %p134
    %p137 = scmp.ne.s32.totalorder %s120, %s136
    %p138 = scmp.eq.s32.totalorder %s18, 0
    %p139 = por %p137, %p138
    %s140 = ssub.s32 %s12, %s19
    %p141 = scmp.eq.s32.totalorder %s140, 0
    %s143 = sadd.s32 %s142, 1
    %s144 = scalar_select %p141, %s142, %s143
    %p147 = pneg %p141
    %p148 = scmp.eq.s32.totalorder %s12, 1
    %p149 = por %p147, %p148
    %p150 = scmp.ne.s32.totalorder %s142, %s145
    %p151 = scmp.eq.s32.totalorder %s12, 0
    %p152 = por %p150, %p151
    %p153 = scmp.ne.s32.totalorder %s142, %s145
    %p154 = scmp.eq.s32.totalorder %s17, 1
    %p155 = por %p153, %p154
    %p156 = scmp.ne.s32.totalorder %s145, %s146
    %p157 = scmp.eq.s32.totalorder %s17, 0
    %p158 = por %p156, %p157
    %p159 = scmp.ne.s32.totalorder %s145, %s146
    %p160 = scmp.eq.s32.totalorder %s18, 1
    %p161 = por %p159, %p160
    %p163 = scmp.ne.s32.totalorder %s146, %s162
    %p164 = scmp.eq.s32.totalorder %s18, 0
    %p165 = por %p163, %p164
    %p166 = scmp.le.s32.totalorder 1, %s12
    %p167 = scmp.lt.s32.totalorder %s12, 3
    %p168 = pnand %p166, %p167
    %p169 = pneg %p168
    // Predicated region
    $region9: #{cnn_block_forward.2} parent=5 // pred_check
      _
    $region10: #{cnn_block_forward.2} parent=5 // pred_check_branch
      %171 = sbr.rel (%p168) target = $region12
    $region11: #{cnn_block_forward.2} parent=5 // pred_region
      %s172 = ssub.s32 %s12, 1
      // Predicated region
      $region13: #{cnn_block_forward.2} parent=11 // pred_check
        %p173 = pneg %p59
      $region14: #{cnn_block_forward.2} parent=11 // pred_check_branch
        %175 = sbr.rel (%p173) target = $region16
      $region15: #{cnn_block_forward.2} parent=11 // pred_region
        _
      $region16: #{cnn_block_forward.2} parent=11 // pred_fallthru
        _
      // Predicated region
      $region17: #{cnn_block_forward.2} parent=11 // pred_check
        %p176 = pneg %p80
      $region18: #{cnn_block_forward.2} parent=11 // pred_check_branch
        %178 = sbr.rel (%p176) target = $region20
      $region19: #{cnn_block_forward.2} parent=11 // pred_region
        _
      $region20: #{cnn_block_forward.2} parent=11 // pred_fallthru
        _
    $region12: #{cnn_block_forward.2} parent=5 // pred_fallthru
      _
    %p179 = scmp.lt.s32.totalorder %s12, 2
    // Predicated region
    $region21: #{cnn_block_forward.2} parent=5 // pred_check
      %p180 = pneg %p179
    $region22: #{cnn_block_forward.2} parent=5 // pred_check_branch
      %182 = sbr.rel (%p180) target = $region24
    $region23: #{cnn_block_forward.2} parent=5 // pred_region
      // Predicated region
      $region25: #{cnn_block_forward.2} parent=23 // pred_check
        %p183 = pneg %p32
      $region26: #{cnn_block_forward.2} parent=23 // pred_check_branch
        %185 = sbr.rel (%p183) target = $region28
      $region27: #{cnn_block_forward.2} parent=23 // pred_region
        %p186 = scmp.lt.s32.totalorder %s12, 1
        %s187 = scalar_select %p186, %s12, 1
        %s188 = smul.addr %s187, 3
        %s189 = smul.addr %s188, 4
        %s190 = scalar_lea.vmem %s0, %s189
      $region28: #{cnn_block_forward.2} parent=23 // pred_fallthru
        _
    $region24: #{cnn_block_forward.2} parent=5 // pred_fallthru
      _
    %p191 = scmp.le.s32.totalorder 1, %s12
    %p192 = scmp.lt.s32.totalorder %s12, 3
    %p193 = pnand %p191, %p192
    %p194 = pneg %p193
    // Predicated region
    $region29: #{cnn_block_forward.2} parent=5 // pred_check
      _
    $region30: #{cnn_block_forward.2} parent=5 // pred_check_branch
      %196 = sbr.rel (%p193) target = $region32
    $region31: #{cnn_block_forward.2} parent=5 // pred_region
      %s197 = ssub.s32 %s12, 1
      %p198 = scmp.lt.s32.totalorder %s17, 1
      %s199 = scalar_select %p198, %s17, 1
      %s200 = smul.addr %s199, 3
      %s201 = smul.addr %s200, 4
      %s202 = scalar_lea.vmem %s0, %s201
      %p203 = pneg %p38
      %p204 = pneg %p35
      %p205 = pneg %p59
      %p206 = pneg %p56
      %p207 = pneg %p80
      %p208 = pneg %p77
      %p209 = pneg %p106
      %p210 = pneg %p103
      %p211 = scmp.lt.s32.totalorder %s17, 1
      %s212 = scalar_select %p211, %s17, 1
      %s213 = smul.addr %s212, 3
      %s214 = smul.addr %s213, 8
      %s215 = scalar_lea.vmem %s3, %s214
      %p216 = pneg %p132
      %p217 = pneg %p129
      %p218 = scmp.lt.s32.totalorder %s17, 1
      %s219 = scalar_select %p218, %s17, 1
      %s220 = smul.addr %s219, 8
      %s221 = scalar_lea.vmem %s4, %s220
      %p222 = pneg %p158
      %p223 = pneg %p155
      %p224 = scmp.lt.s32.totalorder %s17, 1
      %s225 = scalar_select %p224, %s17, 1
      %s226 = smul.addr %s225, 8
      %s227 = scalar_lea.vmem %s5, %s226
      %p228 = scmp.lt.s32.totalorder %s17, 1
      %s229 = scalar_select %p228, %s17, 1
      %s230 = smul.addr %s229, 3
      %s231 = smul.addr %s230, 4
      %s232 = scalar_lea.vmem %s0, %s231
      %p233 = scmp.lt.s32.totalorder %s17, 1
      %s234 = scalar_select %p233, %s17, 1
      %s235 = smul.addr %s234, 3
      %s236 = smul.addr %s235, 8
      %s237 = scalar_lea.vmem %s3, %s236
      %p238 = scmp.lt.s32.totalorder %s17, 1
      %s239 = scalar_select %p238, %s17, 1
      %s240 = smul.addr %s239, 8
      %s241 = scalar_lea.vmem %s4, %s240
      %p242 = scmp.lt.s32.totalorder %s17, 1
      %s243 = scalar_select %p242, %s17, 1
      %s244 = smul.addr %s243, 8
      %s245 = scalar_lea.vmem %s5, %s244
      %v247 = vld [vmem:[%s232] sm:$0xff]
      %v248 = vld [vmem:[%s232 + $0x8] sm:$0xf]
      %v249 = vld [vmem:[%s1] sm:$0xf]
      %s250 = scalar_lea.vmem %s1, 4
      %v251 = vld [vmem:[%s250] sm:$0xf]
      %v254 = vunpack.c.l.b16 %v247
      %v255 = vunpack.c.h.b16 %v247
      %v256 = vunpack.c.l.b16 %v248
      %v257 = vpack.c.b16 %v254, %v254
      %v258 = vpack.c.b16 %v255, %v255
      %v259 = vpack.c.b16 %v256, %v256
      %260 = vrot.lane.b32.xlu0 %v257, 127
      %v261 = vpop.permute.xlu0 %260
      %262 = vrot.lane.b32.xlu0 %v258, 127
      %v263 = vpop.permute.xlu0 %262
      %264 = vrot.lane.b32.xlu0 %v259, 127
      %v265 = vpop.permute.xlu0 %264
      %vm266 = vcmask 1039360
      %v267 = vsel %vm266, %v261, %v263
      %v268 = vsel %vm266, %v263, %v265
      %vm269 = vcmask 64512
      %v271 = vsel %vm269, %v251, 0
      %vm273 = vcmask 1043456
      %v275 = vsel %vm273, %v267, 0
      %v278 = vsel %vm273, %v268, 0
      %v281 = vsel %vm273, %v265, 0
      %283 = vmatpush.bf16.msra.mxu0 0
      %284 = vmatpush.bf16.msra.mxu0 0
      %285 = vmatpush.bf16.msra.mxu0 0
      %286 = vmatpush.bf16.msra.mxu0 0
      %287 = vmatpush.bf16.msra.mxu0 0
      %288 = vmatpush.bf16.msra.mxu0 0
      %289 = vmatpush.bf16.msra.mxu0 0
      %290 = vmatpush.bf16.msra.mxu0 %v275
      %291 = vmatmul.bf16.gmra.mxu0 %v271
      %v292 = vpop.f32.mrf.mxu0
      %v293 = vadd.f32 0.0, %v292
      %v294 = vpop.f32.mrf.mxu0
      %295 = vdwg.mxu0
      %296 = vmatpush.bf16.msra.mxu0 0
      %297 = vmatpush.bf16.msra.mxu0 0
      %298 = vmatpush.bf16.msra.mxu0 0
      %299 = vmatpush.bf16.msra.mxu0 0
      %300 = vmatpush.bf16.msra.mxu0 0
      %301 = vmatpush.bf16.msra.mxu0 0
      %302 = vmatpush.bf16.msra.mxu0 0
      %303 = vmatpush.bf16.msra.mxu0 %v278
      %304 = vmatmul.bf16.gmra.mxu0 %v271
      %v305 = vpop.f32.mrf.mxu0
      %v306 = vadd.f32 0.0, %v305
      %v307 = vpop.f32.mrf.mxu0
      %308 = vdwg.mxu0
      %309 = vmatpush.bf16.msra.mxu0 0
      %310 = vmatpush.bf16.msra.mxu0 0
      %311 = vmatpush.bf16.msra.mxu0 0
      %312 = vmatpush.bf16.msra.mxu0 0
      %313 = vmatpush.bf16.msra.mxu0 0
      %314 = vmatpush.bf16.msra.mxu0 0
      %315 = vmatpush.bf16.msra.mxu0 0
      %316 = vmatpush.bf16.msra.mxu0 %v281
      %317 = vmatmul.bf16.gmra.mxu0 %v271
      %v318 = vpop.f32.mrf.mxu0
      %v319 = vadd.f32 0.0, %v318
      %v320 = vpop.f32.mrf.mxu0
      %321 = vdwg.mxu0
      %v323 = vsel %vm269, %v249, 0
      %v326 = vsel %vm273, %v257, 0
      %v329 = vsel %vm273, %v258, 0
      %v332 = vsel %vm273, %v259, 0
      %334 = vmatpush.bf16.msra.mxu0 0
      %335 = vmatpush.bf16.msra.mxu0 0
      %336 = vmatpush.bf16.msra.mxu0 0
      %337 = vmatpush.bf16.msra.mxu0 0
      %338 = vmatpush.bf16.msra.mxu0 0
      %339 = vmatpush.bf16.msra.mxu0 0
      %340 = vmatpush.bf16.msra.mxu0 0
      %341 = vmatpush.bf16.msra.mxu0 %v326
      %342 = vmatmul.bf16.gmra.mxu0 %v323
      %v343 = vpop.f32.mrf.mxu0
      %v344 = vadd.f32 %v293, %v343
      %v345 = vpop.f32.mrf.mxu0
      %346 = vdwg.mxu0
      %347 = vmatpush.bf16.msra.mxu0 0
      %348 = vmatpush.bf16.msra.mxu0 0
      %349 = vmatpush.bf16.msra.mxu0 0
      %350 = vmatpush.bf16.msra.mxu0 0
      %351 = vmatpush.bf16.msra.mxu0 0
      %352 = vmatpush.bf16.msra.mxu0 0
      %353 = vmatpush.bf16.msra.mxu0 0
      %354 = vmatpush.bf16.msra.mxu0 %v329
      %355 = vmatmul.bf16.gmra.mxu0 %v323
      %v356 = vpop.f32.mrf.mxu0
      %v357 = vadd.f32 %v306, %v356
      %v358 = vpop.f32.mrf.mxu0
      %359 = vdwg.mxu0
      %360 = vmatpush.bf16.msra.mxu0 0
      %361 = vmatpush.bf16.msra.mxu0 0
      %362 = vmatpush.bf16.msra.mxu0 0
      %363 = vmatpush.bf16.msra.mxu0 0
      %364 = vmatpush.bf16.msra.mxu0 0
      %365 = vmatpush.bf16.msra.mxu0 0
      %366 = vmatpush.bf16.msra.mxu0 0
      %367 = vmatpush.bf16.msra.mxu0 %v332
      %368 = vmatmul.bf16.gmra.mxu0 %v323
      %v369 = vpop.f32.mrf.mxu0
      %v370 = vadd.f32 %v319, %v369
      %v371 = vpop.f32.mrf.mxu0
      %372 = vdwg.mxu0
      %s373 = scalar_lea.vmem %s1, 8
      %v374 = vld [vmem:[%s373] sm:$0xf]
      %375 = vrot.lane.b32.xlu0 %v257, 126
      %v376 = vpop.permute.xlu0 %375
      %377 = vrot.lane.b32.xlu0 %v258, 126
      %v378 = vpop.permute.xlu0 %377
      %379 = vrot.lane.b32.xlu0 %v259, 126
      %v380 = vpop.permute.xlu0 %379
      %vm381 = vcmask 1031168
      %v382 = vsel %vm381, %v376, %v378
      %v383 = vsel %vm381, %v378, %v380
      %v385 = vsel %vm269, %v374, 0
      %v388 = vsel %vm273, %v382, 0
      %v391 = vsel %vm273, %v383, 0
      %v394 = vsel %vm273, %v380, 0
      %396 = vmatpush.bf16.msra.mxu0 0
      %397 = vmatpush.bf16.msra.mxu0 0
      %398 = vmatpush.bf16.msra.mxu0 0
      %399 = vmatpush.bf16.msra.mxu0 0
      %400 = vmatpush.bf16.msra.mxu0 0
      %401 = vmatpush.bf16.msra.mxu0 0
      %402 = vmatpush.bf16.msra.mxu0 0
      %403 = vmatpush.bf16.msra.mxu0 %v388
      %404 = vmatmul.bf16.gmra.mxu0 %v385
      %v405 = vpop.f32.mrf.mxu0
      %v406 = vadd.f32 0.0, %v405
      %v407 = vpop.f32.mrf.mxu0
      %408 = vdwg.mxu0
      %409 = vmatpush.bf16.msra.mxu0 0
      %410 = vmatpush.bf16.msra.mxu0 0
      %411 = vmatpush.bf16.msra.mxu0 0
      %412 = vmatpush.bf16.msra.mxu0 0
      %413 = vmatpush.bf16.msra.mxu0 0
      %414 = vmatpush.bf16.msra.mxu0 0
      %415 = vmatpush.bf16.msra.mxu0 0
      %416 = vmatpush.bf16.msra.mxu0 %v391
      %417 = vmatmul.bf16.gmra.mxu0 %v385
      %v418 = vpop.f32.mrf.mxu0
      %v419 = vadd.f32 0.0, %v418
      %v420 = vpop.f32.mrf.mxu0
      %421 = vdwg.mxu0
      %422 = vmatpush.bf16.msra.mxu0 0
      %423 = vmatpush.bf16.msra.mxu0 0
      %424 = vmatpush.bf16.msra.mxu0 0
      %425 = vmatpush.bf16.msra.mxu0 0
      %426 = vmatpush.bf16.msra.mxu0 0
      %427 = vmatpush.bf16.msra.mxu0 0
      %428 = vmatpush.bf16.msra.mxu0 0
      %429 = vmatpush.bf16.msra.mxu0 %v394
      %430 = vmatmul.bf16.gmra.mxu0 %v385
      %v431 = vpop.f32.mrf.mxu0
      %v432 = vadd.f32 0.0, %v431
      %v433 = vpop.f32.mrf.mxu0
      %434 = vdwg.mxu0
      %v435 = vadd.f32 %v344, %v406
      %v436 = vadd.f32 %v357, %v419
      %v437 = vadd.f32 %v370, %v432
      %s438 = scalar_lea.vmem %s1, 12
      %v439 = vld [vmem:[%s438] sm:$0xf]
      %440 = vrot.lane.b32.xlu0 %v257, 110
      %v441 = vpop.permute.xlu0 %440
      %442 = vrot.lane.b32.xlu0 %v258, 110
      %v443 = vpop.permute.xlu0 %442
      %444 = vrot.lane.b32.xlu0 %v259, 110
      %v445 = vpop.permute.xlu0 %444
      %vm446 = vcmask 900096
      %v447 = vsel %vm446, %v441, %v443
      %v448 = vsel %vm446, %v443, %v445
      %v450 = vsel %vm269, %v439, 0
      %v453 = vsel %vm273, %v447, 0
      %v456 = vsel %vm273, %v448, 0
      %v459 = vsel %vm273, %v445, 0
      %461 = vmatpush.bf16.msra.mxu0 0
      %462 = vmatpush.bf16.msra.mxu0 0
      %463 = vmatpush.bf16.msra.mxu0 0
      %464 = vmatpush.bf16.msra.mxu0 0
      %465 = vmatpush.bf16.msra.mxu0 0
      %466 = vmatpush.bf16.msra.mxu0 0
      %467 = vmatpush.bf16.msra.mxu0 0
      %468 = vmatpush.bf16.msra.mxu0 %v453
      %469 = vmatmul.bf16.gmra.mxu0 %v450
      %v470 = vpop.f32.mrf.mxu0
      %v471 = vadd.f32 0.0, %v470
      %v472 = vpop.f32.mrf.mxu0
      %473 = vdwg.mxu0
      %474 = vmatpush.bf16.msra.mxu0 0
      %475 = vmatpush.bf16.msra.mxu0 0
      %476 = vmatpush.bf16.msra.mxu0 0
      %477 = vmatpush.bf16.msra.mxu0 0
      %478 = vmatpush.bf16.msra.mxu0 0
      %479 = vmatpush.bf16.msra.mxu0 0
      %480 = vmatpush.bf16.msra.mxu0 0
      %481 = vmatpush.bf16.msra.mxu0 %v456
      %482 = vmatmul.bf16.gmra.mxu0 %v450
      %v483 = vpop.f32.mrf.mxu0
      %v484 = vadd.f32 0.0, %v483
      %v485 = vpop.f32.mrf.mxu0
      %486 = vdwg.mxu0
      %487 = vmatpush.bf16.msra.mxu0 0
      %488 = vmatpush.bf16.msra.mxu0 0
      %489 = vmatpush.bf16.msra.mxu0 0
      %490 = vmatpush.bf16.msra.mxu0 0
      %491 = vmatpush.bf16.msra.mxu0 0
      %492 = vmatpush.bf16.msra.mxu0 0
      %493 = vmatpush.bf16.msra.mxu0 0
      %494 = vmatpush.bf16.msra.mxu0 %v459
      %495 = vmatmul.bf16.gmra.mxu0 %v450
      %v496 = vpop.f32.mrf.mxu0
      %v497 = vadd.f32 0.0, %v496
      %v498 = vpop.f32.mrf.mxu0
      %499 = vdwg.mxu0
      %v500 = vadd.f32 %v435, %v471
      %v501 = vadd.f32 %v436, %v484
      %v502 = vadd.f32 %v437, %v497
      %s503 = scalar_lea.vmem %s1, 16
      %v504 = vld [vmem:[%s503] sm:$0xf]
      %505 = vrot.lane.b32.xlu0 %v257, 109
      %v506 = vpop.permute.xlu0 %505
      %507 = vrot.lane.b32.xlu0 %v258, 109
      %v508 = vpop.permute.xlu0 %507
      %509 = vrot.lane.b32.xlu0 %v259, 109
      %v510 = vpop.permute.xlu0 %509
      %vm511 = vcmask 891904
      %v512 = vsel %vm511, %v506, %v508
      %v513 = vsel %vm511, %v508, %v510
      %v515 = vsel %vm269, %v504, 0
      %v518 = vsel %vm273, %v512, 0
      %v521 = vsel %vm273, %v513, 0
      %v524 = vsel %vm273, %v510, 0
      %526 = vmatpush.bf16.msra.mxu0 0
      %527 = vmatpush.bf16.msra.mxu0 0
      %528 = vmatpush.bf16.msra.mxu0 0
      %529 = vmatpush.bf16.msra.mxu0 0
      %530 = vmatpush.bf16.msra.mxu0 0
      %531 = vmatpush.bf16.msra.mxu0 0
      %532 = vmatpush.bf16.msra.mxu0 0
      %533 = vmatpush.bf16.msra.mxu0 %v518
      %534 = vmatmul.bf16.gmra.mxu0 %v515
      %v535 = vpop.f32.mrf.mxu0
      %v536 = vadd.f32 0.0, %v535
      %v537 = vpop.f32.mrf.mxu0
      %538 = vdwg.mxu0
      %539 = vmatpush.bf16.msra.mxu0 0
      %540 = vmatpush.bf16.msra.mxu0 0
      %541 = vmatpush.bf16.msra.mxu0 0
      %542 = vmatpush.bf16.msra.mxu0 0
      %543 = vmatpush.bf16.msra.mxu0 0
      %544 = vmatpush.bf16.msra.mxu0 0
      %545 = vmatpush.bf16.msra.mxu0 0
      %546 = vmatpush.bf16.msra.mxu0 %v521
      %547 = vmatmul.bf16.gmra.mxu0 %v515
      %v548 = vpop.f32.mrf.mxu0
      %v549 = vadd.f32 0.0, %v548
      %v550 = vpop.f32.mrf.mxu0
      %551 = vdwg.mxu0
      %552 = vmatpush.bf16.msra.mxu0 0
      %553 = vmatpush.bf16.msra.mxu0 0
      %554 = vmatpush.bf16.msra.mxu0 0
      %555 = vmatpush.bf16.msra.mxu0 0
      %556 = vmatpush.bf16.msra.mxu0 0
      %557 = vmatpush.bf16.msra.mxu0 0
      %558 = vmatpush.bf16.msra.mxu0 0
      %559 = vmatpush.bf16.msra.mxu0 %v524
      %560 = vmatmul.bf16.gmra.mxu0 %v515
      %v561 = vpop.f32.mrf.mxu0
      %v562 = vadd.f32 0.0, %v561
      %v563 = vpop.f32.mrf.mxu0
      %564 = vdwg.mxu0
      %v565 = vadd.f32 %v500, %v536
      %v566 = vadd.f32 %v501, %v549
      %v567 = vadd.f32 %v502, %v562
      %s568 = scalar_lea.vmem %s1, 20
      %v569 = vld [vmem:[%s568] sm:$0xf]
      %570 = vrot.lane.b32.xlu0 %v257, 108
      %v571 = vpop.permute.xlu0 %570
      %572 = vrot.lane.b32.xlu0 %v258, 108
      %v573 = vpop.permute.xlu0 %572
      %574 = vrot.lane.b32.xlu0 %v259, 108
      %v575 = vpop.permute.xlu0 %574
      %vm576 = vcmask 883712
      %v577 = vsel %vm576, %v571, %v573
      %v578 = vsel %vm576, %v573, %v575
      %v580 = vsel %vm269, %v569, 0
      %v583 = vsel %vm273, %v577, 0
      %v586 = vsel %vm273, %v578, 0
      %v589 = vsel %vm273, %v575, 0
      %591 = vmatpush.bf16.msra.mxu0 0
      %592 = vmatpush.bf16.msra.mxu0 0
      %593 = vmatpush.bf16.msra.mxu0 0
      %594 = vmatpush.bf16.msra.mxu0 0
      %595 = vmatpush.bf16.msra.mxu0 0
      %596 = vmatpush.bf16.msra.mxu0 0
      %597 = vmatpush.bf16.msra.mxu0 0
      %598 = vmatpush.bf16.msra.mxu0 %v583
      %599 = vmatmul.bf16.gmra.mxu0 %v580
      %v600 = vpop.f32.mrf.mxu0
      %v601 = vadd.f32 0.0, %v600
      %v602 = vpop.f32.mrf.mxu0
      %603 = vdwg.mxu0
      %604 = vmatpush.bf16.msra.mxu0 0
      %605 = vmatpush.bf16.msra.mxu0 0
      %606 = vmatpush.bf16.msra.mxu0 0
      %607 = vmatpush.bf16.msra.mxu0 0
      %608 = vmatpush.bf16.msra.mxu0 0
      %609 = vmatpush.bf16.msra.mxu0 0
      %610 = vmatpush.bf16.msra.mxu0 0
      %611 = vmatpush.bf16.msra.mxu0 %v586
      %612 = vmatmul.bf16.gmra.mxu0 %v580
      %v613 = vpop.f32.mrf.mxu0
      %v614 = vadd.f32 0.0, %v613
      %v615 = vpop.f32.mrf.mxu0
      %616 = vdwg.mxu0
      %617 = vmatpush.bf16.msra.mxu0 0
      %618 = vmatpush.bf16.msra.mxu0 0
      %619 = vmatpush.bf16.msra.mxu0 0
      %620 = vmatpush.bf16.msra.mxu0 0
      %621 = vmatpush.bf16.msra.mxu0 0
      %622 = vmatpush.bf16.msra.mxu0 0
      %623 = vmatpush.bf16.msra.mxu0 0
      %624 = vmatpush.bf16.msra.mxu0 %v589
      %625 = vmatmul.bf16.gmra.mxu0 %v580
      %v626 = vpop.f32.mrf.mxu0
      %v627 = vadd.f32 0.0, %v626
      %v628 = vpop.f32.mrf.mxu0
      %629 = vdwg.mxu0
      %v630 = vadd.f32 %v565, %v601
      %v631 = vadd.f32 %v566, %v614
      %v632 = vadd.f32 %v567, %v627
      %s633 = scalar_lea.vmem %s1, 24
      %v634 = vld [vmem:[%s633] sm:$0xf]
      %635 = vrot.lane.b32.xlu0 %v257, 92
      %v636 = vpop.permute.xlu0 %635
      %637 = vrot.lane.b32.xlu0 %v258, 92
      %v638 = vpop.permute.xlu0 %637
      %639 = vrot.lane.b32.xlu0 %v259, 92
      %v640 = vpop.permute.xlu0 %639
      %vm641 = vcmask 752640
      %v642 = vsel %vm641, %v636, %v638
      %v643 = vsel %vm641, %v638, %v640
      %v645 = vsel %vm269, %v634, 0
      %v648 = vsel %vm273, %v642, 0
      %v651 = vsel %vm273, %v643, 0
      %v654 = vsel %vm273, %v640, 0
      %656 = vmatpush.bf16.msra.mxu0 0
      %657 = vmatpush.bf16.msra.mxu0 0
      %658 = vmatpush.bf16.msra.mxu0 0
      %659 = vmatpush.bf16.msra.mxu0 0
      %660 = vmatpush.bf16.msra.mxu0 0
      %661 = vmatpush.bf16.msra.mxu0 0
      %662 = vmatpush.bf16.msra.mxu0 0
      %663 = vmatpush.bf16.msra.mxu0 %v648
      %664 = vmatmul.bf16.gmra.mxu0 %v645
      %v665 = vpop.f32.mrf.mxu0
      %v666 = vadd.f32 0.0, %v665
      %v667 = vpop.f32.mrf.mxu0
      %668 = vdwg.mxu0
      %669 = vmatpush.bf16.msra.mxu0 0
      %670 = vmatpush.bf16.msra.mxu0 0
      %671 = vmatpush.bf16.msra.mxu0 0
      %672 = vmatpush.bf16.msra.mxu0 0
      %673 = vmatpush.bf16.msra.mxu0 0
      %674 = vmatpush.bf16.msra.mxu0 0
      %675 = vmatpush.bf16.msra.mxu0 0
      %676 = vmatpush.bf16.msra.mxu0 %v651
      %677 = vmatmul.bf16.gmra.mxu0 %v645
      %v678 = vpop.f32.mrf.mxu0
      %v679 = vadd.f32 0.0, %v678
      %v680 = vpop.f32.mrf.mxu0
      %681 = vdwg.mxu0
      %682 = vmatpush.bf16.msra.mxu0 0
      %683 = vmatpush.bf16.msra.mxu0 0
      %684 = vmatpush.bf16.msra.mxu0 0
      %685 = vmatpush.bf16.msra.mxu0 0
      %686 = vmatpush.bf16.msra.mxu0 0
      %687 = vmatpush.bf16.msra.mxu0 0
      %688 = vmatpush.bf16.msra.mxu0 0
      %689 = vmatpush.bf16.msra.mxu0 %v654
      %690 = vmatmul.bf16.gmra.mxu0 %v645
      %v691 = vpop.f32.mrf.mxu0
      %v692 = vadd.f32 0.0, %v691
      %v693 = vpop.f32.mrf.mxu0
      %694 = vdwg.mxu0
      %v695 = vadd.f32 %v630, %v666
      %v696 = vadd.f32 %v631, %v679
      %v697 = vadd.f32 %v632, %v692
      %s698 = scalar_lea.vmem %s1, 28
      %v699 = vld [vmem:[%s698] sm:$0xf]
      %700 = vrot.lane.b32.xlu0 %v257, 91
      %v701 = vpop.permute.xlu0 %700
      %702 = vrot.lane.b32.xlu0 %v258, 91
      %v703 = vpop.permute.xlu0 %702
      %704 = vrot.lane.b32.xlu0 %v259, 91
      %v705 = vpop.permute.xlu0 %704
      %vm706 = vcmask 744448
      %v707 = vsel %vm706, %v701, %v703
      %v708 = vsel %vm706, %v703, %v705
      %v710 = vsel %vm269, %v699, 0
      %v713 = vsel %vm273, %v707, 0
      %v716 = vsel %vm273, %v708, 0
      %v719 = vsel %vm273, %v705, 0
      %721 = vmatpush.bf16.msra.mxu0 0
      %722 = vmatpush.bf16.msra.mxu0 0
      %723 = vmatpush.bf16.msra.mxu0 0
      %724 = vmatpush.bf16.msra.mxu0 0
      %725 = vmatpush.bf16.msra.mxu0 0
      %726 = vmatpush.bf16.msra.mxu0 0
      %727 = vmatpush.bf16.msra.mxu0 0
      %728 = vmatpush.bf16.msra.mxu0 %v713
      %729 = vmatmul.bf16.gmra.mxu0 %v710
      %v730 = vpop.f32.mrf.mxu0
      %v731 = vadd.f32 0.0, %v730
      %v732 = vpop.f32.mrf.mxu0
      %733 = vdwg.mxu0
      %734 = vmatpush.bf16.msra.mxu0 0
      %735 = vmatpush.bf16.msra.mxu0 0
      %736 = vmatpush.bf16.msra.mxu0 0
      %737 = vmatpush.bf16.msra.mxu0 0
      %738 = vmatpush.bf16.msra.mxu0 0
      %739 = vmatpush.bf16.msra.mxu0 0
      %740 = vmatpush.bf16.msra.mxu0 0
      %741 = vmatpush.bf16.msra.mxu0 %v716
      %742 = vmatmul.bf16.gmra.mxu0 %v710
      %v743 = vpop.f32.mrf.mxu0
      %v744 = vadd.f32 0.0, %v743
      %v745 = vpop.f32.mrf.mxu0
      %746 = vdwg.mxu0
      %747 = vmatpush.bf16.msra.mxu0 0
      %748 = vmatpush.bf16.msra.mxu0 0
      %749 = vmatpush.bf16.msra.mxu0 0
      %750 = vmatpush.bf16.msra.mxu0 0
      %751 = vmatpush.bf16.msra.mxu0 0
      %752 = vmatpush.bf16.msra.mxu0 0
      %753 = vmatpush.bf16.msra.mxu0 0
      %754 = vmatpush.bf16.msra.mxu0 %v719
      %755 = vmatmul.bf16.gmra.mxu0 %v710
      %v756 = vpop.f32.mrf.mxu0
      %v757 = vadd.f32 0.0, %v756
      %v758 = vpop.f32.mrf.mxu0
      %759 = vdwg.mxu0
      %v760 = vadd.f32 %v695, %v731
      %v761 = vadd.f32 %v696, %v744
      %v762 = vadd.f32 %v697, %v757
      %s763 = scalar_lea.vmem %s1, 32
      %v764 = vld [vmem:[%s763] sm:$0xf]
      %765 = vrot.lane.b32.xlu0 %v257, 90
      %v766 = vpop.permute.xlu0 %765
      %767 = vrot.lane.b32.xlu0 %v258, 90
      %v768 = vpop.permute.xlu0 %767
      %769 = vrot.lane.b32.xlu0 %v259, 90
      %v770 = vpop.permute.xlu0 %769
      %vm771 = vcmask 736256
      %v772 = vsel %vm771, %v766, %v768
      %v773 = vsel %vm771, %v768, %v770
      %v775 = vsel %vm269, %v764, 0
      %v778 = vsel %vm273, %v772, 0
      %v781 = vsel %vm273, %v773, 0
      %v784 = vsel %vm273, %v770, 0
      %786 = vmatpush.bf16.msra.mxu0 0
      %787 = vmatpush.bf16.msra.mxu0 0
      %788 = vmatpush.bf16.msra.mxu0 0
      %789 = vmatpush.bf16.msra.mxu0 0
      %790 = vmatpush.bf16.msra.mxu0 0
      %791 = vmatpush.bf16.msra.mxu0 0
      %792 = vmatpush.bf16.msra.mxu0 0
      %793 = vmatpush.bf16.msra.mxu0 %v778
      %794 = vmatmul.bf16.gmra.mxu0 %v775
      %v795 = vpop.f32.mrf.mxu0
      %v796 = vadd.f32 0.0, %v795
      %v797 = vpop.f32.mrf.mxu0
      %798 = vdwg.mxu0
      %799 = vmatpush.bf16.msra.mxu0 0
      %800 = vmatpush.bf16.msra.mxu0 0
      %801 = vmatpush.bf16.msra.mxu0 0
      %802 = vmatpush.bf16.msra.mxu0 0
      %803 = vmatpush.bf16.msra.mxu0 0
      %804 = vmatpush.bf16.msra.mxu0 0
      %805 = vmatpush.bf16.msra.mxu0 0
      %806 = vmatpush.bf16.msra.mxu0 %v781
      %807 = vmatmul.bf16.gmra.mxu0 %v775
      %v808 = vpop.f32.mrf.mxu0
      %v809 = vadd.f32 0.0, %v808
      %v810 = vpop.f32.mrf.mxu0
      %811 = vdwg.mxu0
      %812 = vmatpush.bf16.msra.mxu0 0
      %813 = vmatpush.bf16.msra.mxu0 0
      %814 = vmatpush.bf16.msra.mxu0 0
      %815 = vmatpush.bf16.msra.mxu0 0
      %816 = vmatpush.bf16.msra.mxu0 0
      %817 = vmatpush.bf16.msra.mxu0 0
      %818 = vmatpush.bf16.msra.mxu0 0
      %819 = vmatpush.bf16.msra.mxu0 %v784
      %820 = vmatmul.bf16.gmra.mxu0 %v775
      %v821 = vpop.f32.mrf.mxu0
      %v822 = vadd.f32 0.0, %v821
      %v823 = vpop.f32.mrf.mxu0
      %824 = vdwg.mxu0
      %v825 = vadd.f32 %v760, %v796
      %v826 = vadd.f32 %v761, %v809
      %v827 = vadd.f32 %v762, %v822
      %828 = vst [vmem:[%s237] sm:$0xff] %v825
      %829 = vst [vmem:[%s237 + $0x8] sm:$0xff] %v826
      %vm830 = vcmask 261120
      %831 = vst.msk [vmem:[%s237 + $0x10] sm:$0xff] %vm830, %v827
      %v832 = vld [vmem:[%s2] sm:$0x7]
      %v834 = vperm.slane %v832, 0
      %v835 = vperm.slane %v832, 1
      %v836 = vperm.slane %v832, 2
      %v840 = vmul.f32 %v825, %v834
      %v841 = vmul.f32 %v826, %v835
      %v842 = vmul.f32 %v827, %v836
      %v843 = vadd.f32 %v840, %v841
      %v844 = vsel %vm830, %v842, 0.0
      %v845 = vadd.f32 %v843, %v844
      %846 = vadd.xlane.f32.xlu0 %v845
      %v847 = vpop.xlane.xlu0 %846
      %vm848 = vcmask 7168
      %849 = vst.msk [vmem:[%s241] sm:$0xff] %vm848, %v847
      %v850 = vmul.f32 %v840, %v825
      %v851 = vmul.f32 %v841, %v826
      %v852 = vmul.f32 %v842, %v827
      %v853 = vadd.f32 %v850, %v851
      %v854 = vsel %vm830, %v852, 0.0
      %v855 = vadd.f32 %v853, %v854
      %856 = vadd.xlane.f32.xlu0 %v855
      %v857 = vpop.xlane.xlu0 %856
      %858 = vst.msk [vmem:[%s245] sm:$0xff] %vm848, %v857
      %p859 = scmp.lt.s32.totalorder %s17, 1
      %s860 = scalar_select %p859, %s17, 1
      %s861 = smul.addr %s860, 3
      %s862 = smul.addr %s861, 8
      %s863 = scalar_lea.vmem %s3, %s862
      %p864 = scmp.lt.s32.totalorder %s17, 1
      %s865 = scalar_select %p864, %s17, 1
      %s866 = smul.addr %s865, 8
      %s867 = scalar_lea.vmem %s4, %s866
      %p868 = scmp.lt.s32.totalorder %s17, 1
      %s869 = scalar_select %p868, %s17, 1
      %s870 = smul.addr %s869, 8
      %s871 = scalar_lea.vmem %s5, %s870
      // Predicated region
      $region33: #{cnn_block_forward.2} parent=31 // pred_check
        %p872 = pneg %p103
      $region34: #{cnn_block_forward.2} parent=31 // pred_check_branch
        %874 = sbr.rel (%p872) target = $region36
      $region35: #{cnn_block_forward.2} parent=31 // pred_region
        _
      $region36: #{cnn_block_forward.2} parent=31 // pred_fallthru
        _
      // Predicated region
      $region37: #{cnn_block_forward.2} parent=31 // pred_check
        %p875 = pneg %p129
      $region38: #{cnn_block_forward.2} parent=31 // pred_check_branch
        %877 = sbr.rel (%p875) target = $region40
      $region39: #{cnn_block_forward.2} parent=31 // pred_region
        _
      $region40: #{cnn_block_forward.2} parent=31 // pred_fallthru
        _
      // Predicated region
      $region41: #{cnn_block_forward.2} parent=31 // pred_check
        %p878 = pneg %p155
      $region42: #{cnn_block_forward.2} parent=31 // pred_check_branch
        %880 = sbr.rel (%p878) target = $region44
      $region43: #{cnn_block_forward.2} parent=31 // pred_region
        _
      $region44: #{cnn_block_forward.2} parent=31 // pred_fallthru
        _
    $region32: #{cnn_block_forward.2} parent=5 // pred_fallthru
      _
    %p881 = scmp.le.s32.totalorder 2, %s12
    // Predicated region
    $region45: #{cnn_block_forward.2} parent=5 // pred_check
      %p882 = pneg %p881
    $region46: #{cnn_block_forward.2} parent=5 // pred_check_branch
      %884 = sbr.rel (%p882) target = $region48
    $region47: #{cnn_block_forward.2} parent=5 // pred_region
      %s885 = ssub.s32 %s12, 2
      // Predicated region
      $region49: #{cnn_block_forward.2} parent=47 // pred_check
        %p886 = pneg %p109
      $region50: #{cnn_block_forward.2} parent=47 // pred_check_branch
        %888 = sbr.rel (%p886) target = $region52
      $region51: #{cnn_block_forward.2} parent=47 // pred_region
        %p889 = scmp.lt.s32.totalorder %s18, 1
        %s890 = scalar_select %p889, %s18, 1
        %s891 = smul.addr %s890, 3
        %s892 = smul.addr %s891, 8
        %s893 = scalar_lea.vmem %s3, %s892
      $region52: #{cnn_block_forward.2} parent=47 // pred_fallthru
        _
      // Predicated region
      $region53: #{cnn_block_forward.2} parent=47 // pred_check
        %p894 = pneg %p135
      $region54: #{cnn_block_forward.2} parent=47 // pred_check_branch
        %896 = sbr.rel (%p894) target = $region56
      $region55: #{cnn_block_forward.2} parent=47 // pred_region
        %p897 = scmp.lt.s32.totalorder %s18, 1
        %s898 = scalar_select %p897, %s18, 1
        %s899 = smul.addr %s898, 8
        %s900 = scalar_lea.vmem %s4, %s899
      $region56: #{cnn_block_forward.2} parent=47 // pred_fallthru
        _
      // Predicated region
      $region57: #{cnn_block_forward.2} parent=47 // pred_check
        %p901 = pneg %p161
      $region58: #{cnn_block_forward.2} parent=47 // pred_check_branch
        %903 = sbr.rel (%p901) target = $region60
      $region59: #{cnn_block_forward.2} parent=47 // pred_region
        %p904 = scmp.lt.s32.totalorder %s18, 1
        %s905 = scalar_select %p904, %s18, 1
        %s906 = smul.addr %s905, 8
        %s907 = scalar_lea.vmem %s5, %s906
      $region60: #{cnn_block_forward.2} parent=47 // pred_fallthru
        _
    $region48: #{cnn_block_forward.2} parent=5 // pred_fallthru
      _
  $region6: #{cnn_block_forward.2} parent=0 // loop_footer
    %s16 = sadd.s32 1, %s12
  $region7: #{cnn_block_forward.2} parent=0 // loop_footer_branch
    %11 = sbr.rel target = $region3
  $region8: #{cnn_block_forward.2} parent=0 // loop_exit
    _

</llo_original>
